<compile_context>
chip_gen: v7x
topology: tpu7x:2x2x1
jax: 0.10.0
libtpu: 0.0.40
codegen_flags: <defaults>
</compile_context>

<pallas_src>
import jax
import jax.numpy as jnp
from jax.experimental import pallas as pl
from jax.experimental.pallas import tpu as pltpu

_BIG = 1e30   # additive penalty for padded points (also masked out by index)


def _round_up(x, m):
    return ((x + m - 1) // m) * m


def _make_kernel(Np, Tp, Sp, Ng_pad, Tgc, n_strips, n_chunks):
    """Chamfer tile kernel with static shape parameters baked in."""

    def kernel(pred_ref, gt_ref, psum_ref, colmin_ref):
        # pred_ref:   (1, Tp, CA)       augmented pred tile (MXU LHS layout)
        # gt_ref:     (1, CA, Ng_pad)   augmented gt cloud  (MXU RHS layout)
        # psum_ref:   (1, 1, 1, 1)      sum_i sqrt(min_j d2) for this pred tile
        # colmin_ref: (1, 1, 1, Ng_pad) min_{i in tile} d2 for every gt point
        ip = pl.program_id(1)
        row_base = ip * Tp

        # gt-side running minima for this (batch, pred-tile) output block.
        colmin_ref[...] = jnp.full((1, 1, 1, Ng_pad), _BIG, jnp.float32)

        def strip_body(s, acc):
            soff = pl.multiple_of(s * Sp, 8)
            p_strip = pred_ref[0, pl.ds(soff, Sp), :].astype(jnp.float32)  # (Sp, CA)

            def chunk_body(k, rmin):
                koff = pl.multiple_of(k * Tgc, 128)
                g_chunk = gt_ref[0, :, pl.ds(koff, Tgc)].astype(jnp.float32)  # (CA,Tgc)
                # One MXU matmul gives the full squared distances for the tile:
                #   d2 = |p|^2 + |g|^2 - 2 p.g   (+ padding penalties).
                d2 = jnp.dot(p_strip, g_chunk,
                             preferred_element_type=jnp.float32,
                             precision=jax.lax.Precision.HIGHEST)            # (Sp,Tgc)
                # gt-side running min over pred strips (sublane reduction).
                seg = colmin_ref[0, 0, :, pl.ds(koff, Tgc)]
                colmin_ref[0, 0, :, pl.ds(koff, Tgc)] = jnp.minimum(
                    seg, jnp.min(d2, axis=0, keepdims=True))
                # pred-side running min over gt chunks (lane reduction).
                return jnp.minimum(rmin, jnp.min(d2, axis=1, keepdims=True))

            rmin = jax.lax.fori_loop(
                0, n_chunks, chunk_body, jnp.full((Sp, 1), _BIG, jnp.float32))

            # Deferred clamp + sqrt on the (Sp,) minima only; mask padded pred
            # rows by global index before summing.
            ridx = jax.lax.broadcasted_iota(jnp.int32, (Sp, 1), 0) + (row_base + soff)
            dist = jnp.sqrt(jnp.maximum(rmin, 0.0))
            dist = jnp.where(ridx < Np, dist, 0.0)
            return acc + jnp.sum(dist)

        acc = jax.lax.fori_loop(0, n_strips, strip_body,
                                jnp.zeros((1, 1), jnp.float32), unroll=True)
        psum_ref[0, 0] = acc

    return kernel


def chamfer_loss(predict_pc, gt_pc, reduction="mean",
                 tile_pred=512, strip_pred=128, chunk_gt=256):
    """Pallas TPU Chamfer loss.  predict_pc: (B, C, Np), gt_pc: (B, C, Ng)."""
    B, C, Np = predict_pc.shape
    Bg, Cg, Ng = gt_pc.shape
    assert B == Bg and C == Cg

    CA = _round_up(C + 2, 8)            # augmented channel dim (sublane-aligned)

    Sp = _round_up(min(strip_pred, _round_up(Np, 8)), 8)       # pred rows / MXU tile
    Tp = _round_up(min(tile_pred, _round_up(Np, Sp)), Sp)      # pred rows / grid step
    Np_pad = _round_up(Np, Tp)
    n_ip = Np_pad // Tp
    n_strips = Tp // Sp

    Tgc = _round_up(min(chunk_gt, _round_up(Ng, 128)), 128)    # gt lane chunk
    Ng_pad = _round_up(Ng, Tgc)
    n_chunks = Ng_pad // Tgc

    f32 = jnp.float32
    p = jnp.transpose(predict_pc.astype(f32), (0, 2, 1))       # (B, Np, C)
    g = gt_pc.astype(f32)                                      # (B, C, Ng)

    # Augmented clouds: a single matmul then produces d2 exactly; padded points
    # carry a +_BIG penalty in the norm slot (index masks remove them anyway).
    zp = jnp.zeros((B, Np, CA - C - 2), f32)
    pred_aug = jnp.concatenate(
        [p, zp, jnp.ones((B, Np, 1), f32),
         jnp.sum(p * p, axis=-1, keepdims=True)], axis=-1)     # (B, Np, CA)
    if Np_pad > Np:
        pad = jnp.zeros((B, Np_pad - Np, CA), f32).at[:, :, CA - 1].set(_BIG)
        pred_aug = jnp.concatenate([pred_aug, pad], axis=1)

    zg = jnp.zeros((B, CA - C - 2, Ng), f32)
    gt_aug = jnp.concatenate(
        [-2.0 * g, zg, jnp.sum(g * g, axis=1, keepdims=True),
         jnp.ones((B, 1, Ng), f32)], axis=1)                   # (B, CA, Ng)
    if Ng_pad > Ng:
        pad = jnp.zeros((B, CA, Ng_pad - Ng), f32).at[:, CA - 2, :].set(_BIG)
        gt_aug = jnp.concatenate([gt_aug, pad], axis=2)

    kernel = _make_kernel(Np, Tp, Sp, Ng_pad, Tgc, n_strips, n_chunks)

    # VMEM budget: double-buffered pred tile + whole-cloud gt block + outputs.
    # TODO(synk): for gt clouds beyond ~256K points (v7x: 64 MiB VMEM) reintroduce
    # a gt grid axis instead of keeping the whole cloud resident per batch.
    vmem_need = 4 * (2 * Tp * CA + 2 * CA * Ng_pad + 2 * (Ng_pad + 8)) + (2 << 20)
    vmem_limit = int(min(max(vmem_need, 24 << 20), 56 << 20))

    psum, colmin = pl.pallas_call(
        kernel,
        out_shape=(jax.ShapeDtypeStruct((B, n_ip, 1, 1), f32),
                   jax.ShapeDtypeStruct((B, n_ip, 1, Ng_pad), f32)),
        grid_spec=pltpu.PrefetchScalarGridSpec(
            num_scalar_prefetch=0,
            grid=(B, n_ip),
            in_specs=[
                pl.BlockSpec((1, Tp, CA), lambda b, i: (b, i, 0)),
                # Whole padded gt cloud: re-DMA'd only when the batch changes.
                pl.BlockSpec((1, CA, Ng_pad), lambda b, i: (b, 0, 0)),
            ],
            out_specs=(
                pl.BlockSpec((1, 1, 1, 1), lambda b, i: (b, i, 0, 0)),
                pl.BlockSpec((1, 1, 1, Ng_pad), lambda b, i: (b, i, 0, 0)),
            ),
        ),
        compiler_params=pltpu.CompilerParams(
            dimension_semantics=("parallel", "parallel"),
            vmem_limit_bytes=vmem_limit),
    )(pred_aug, gt_aug)

    # Finalize (O(B*(Np+Ng)) plain-JAX glue).
    pred_term = jnp.sum(psum)
    col_min = jnp.min(colmin[:, :, 0, :Ng], axis=1)            # (B, Ng)
    gt_term = jnp.sum(jnp.sqrt(jnp.maximum(col_min, 0.0)))
    total = pred_term + gt_term
    if reduction != "sum":
        total = total / B            # len(gt_pc) == batch size, as in PyTorch
    return total


def chamfer_ref(predict_pc, gt_pc, reduction="mean"):
    """Pure-JAX mirror of the PyTorch forward for correctness checking."""
    diff1 = gt_pc[:, :, None, :] - predict_pc[:, :, :, None]          # (B,C,Np,Ng)
    z = jnp.min(jnp.sqrt(jnp.sum(diff1 * diff1, axis=1)), axis=-2)    # (B,Ng)
    diff2 = predict_pc[:, :, None, :] - gt_pc[:, :, :, None]          # (B,C,Ng,Np)
    z2 = jnp.min(jnp.sqrt(jnp.sum(diff2 * diff2, axis=1)), axis=-2)   # (B,Np)
    B = gt_pc.shape[0]
    if reduction != "sum":
        return z.sum() / B + z2.sum() / B
    return z.sum() + z2.sum()


if __name__ == "__main__":
    key = jax.random.PRNGKey(0)
    k1, k2 = jax.random.split(key)
    B, C, Np, Ng = 2, 3, 160, 200   # non-aligned sizes: padding + masking paths
    predict_pc = jax.random.normal(k1, (B, C, Np), dtype=jnp.float32)
    gt_pc = jax.random.normal(k2, (B, C, Ng), dtype=jnp.float32)

    # Small tiles so the multi-tile / multi-chunk / multi-strip paths execute.
    loss = chamfer_loss(predict_pc, gt_pc, reduction="mean",
                        tile_pred=64, strip_pred=32, chunk_gt=128)
    jax.block_until_ready(loss)
    ref = chamfer_ref(predict_pc, gt_pc, reduction="mean")
    assert jnp.allclose(loss, ref, rtol=1e-4, atol=1e-4), (float(loss), float(ref))

    # Default (single-tile, single-chunk) path + 'sum' reduction.
    loss_sum = chamfer_loss(predict_pc, gt_pc, reduction="sum")
    jax.block_until_ready(loss_sum)
    ref_sum = chamfer_ref(predict_pc, gt_pc, reduction="sum")
    assert jnp.allclose(loss_sum, ref_sum, rtol=1e-4, atol=1e-4), (
        float(loss_sum), float(ref_sum))

    print("KERNEL_OK")
</pallas_src>

<mosaic_0001>
module attributes {stable_mosaic.version = 11 : i64} {
  func.func @kernel(%arg0: i32, %arg1: i32, %arg2: memref<1x64x8xf32, #tpu.memory_space<vmem>>, %arg3: memref<1x8x256xf32, #tpu.memory_space<vmem>>, %arg4: memref<1x1x1x1xf32, #tpu.memory_space<vmem>>, %arg5: memref<1x1x1x256xf32, #tpu.memory_space<vmem>>) attributes {dimension_semantics = [#tpu.dimension_semantics<parallel>, #tpu.dimension_semantics<parallel>], iteration_bounds = array<i64: 2, 3>, scalar_prefetch = 0 : i64, scratch_operands = 0 : i64, tpu.core_type = #tpu.core_type<tc>, window_params = [{transform_indices = @transform_0, window_bounds = array<i64: 1, 64, 8>}, {transform_indices = @transform_1, window_bounds = array<i64: 1, 8, 256>}, {transform_indices = @transform_2, window_bounds = array<i64: 1, 1, 1, 1>}, {transform_indices = @transform_3, window_bounds = array<i64: 1, 1, 1, 256>}]} {
    %c64_i32 = arith.constant 64 : i32
    %0 = arith.muli %arg1, %c64_i32 : i32
    %cst = arith.constant 1.000000e+30 : f32
    %1 = vector.broadcast %cst : f32 to vector<1x1x1x256xf32>
    %c0 = arith.constant 0 : index
    %c0_0 = arith.constant 0 : index
    %c0_1 = arith.constant 0 : index
    %c0_2 = arith.constant 0 : index
    %2 = vector.load %arg5[%c0, %c0_0, %c0_1, %c0_2] : memref<1x1x1x256xf32, #tpu.memory_space<vmem>>, vector<1x1x1x256xf32>
    tpu.vector_store %arg5[%c0, %c0_0, %c0_1, %c0_2], %1 {strides = array<i32>} : memref<1x1x1x256xf32, #tpu.memory_space<vmem>>, vector<1x1x1x256xf32>,
    %cst_3 = arith.constant 0.000000e+00 : f32
    %3 = vector.broadcast %cst_3 : f32 to vector<1x1xf32>
    %c0_i32 = arith.constant 0 : i32
    %c32_i32 = arith.constant 32 : i32
    %4 = arith.muli %c0_i32, %c32_i32 : i32
    %5 = tpu.assume_multiple %4, 8 : i32
    %c0_4 = arith.constant 0 : index
    %6 = arith.index_cast %5 : i32 to index
    %c0_5 = arith.constant 0 : index
    %7 = vector.load %arg2[%c0_4, %6, %c0_5] : memref<1x64x8xf32, #tpu.memory_space<vmem>>, vector<1x32x8xf32>
    %8 = vector.shape_cast %7 : vector<1x32x8xf32> to vector<32x8xf32>
    %cst_6 = arith.constant 1.000000e+30 : f32
    %9 = vector.broadcast %cst_6 : f32 to vector<32x1xf32>
    %c0_i32_7 = arith.constant 0 : i32
    %c2_i32 = arith.constant 2 : i32
    %10 = arith.addi %c0_i32_7, %c2_i32 : i32
    %c1_i32 = arith.constant 1 : i32
    %11 = scf.for %arg6 = %c0_i32_7 to %10 step %c1_i32 iter_args(%arg7 = %9) -> (vector<32x1xf32>)  : i32 {
      %c128_i32 = arith.constant 128 : i32
      %57 = arith.muli %arg6, %c128_i32 : i32
      %58 = tpu.assume_multiple %57, 128 : i32
      %c0_30 = arith.constant 0 : index
      %c0_31 = arith.constant 0 : index
      %59 = arith.index_cast %58 : i32 to index
      %60 = vector.load %arg3[%c0_30, %c0_31, %59] : memref<1x8x256xf32, #tpu.memory_space<vmem>>, vector<1x8x128xf32>
      %61 = vector.shape_cast %60 : vector<1x8x128xf32> to vector<8x128xf32>
      %cst_32 = arith.constant dense<0.000000e+00> : vector<32x128xf32>
      %62 = tpu.matmul %8, %61, %cst_32 {dimension_numbers = #tpu.dot_dimension_numbers<[1], [0], [0], [1], [0, 0, 1, 1], [], []>, precision = #tpu.contract_precision<fp32>} : vector<32x8xf32>, vector<8x128xf32>, vector<32x128xf32> -> vector<32x128xf32>
      %c0_33 = arith.constant 0 : index
      %c0_34 = arith.constant 0 : index
      %c0_35 = arith.constant 0 : index
      %63 = arith.index_cast %58 : i32 to index
      %64 = vector.load %arg5[%c0_33, %c0_34, %c0_35, %63] : memref<1x1x1x256xf32, #tpu.memory_space<vmem>>, vector<1x1x1x128xf32>
      %65 = vector.shape_cast %64 : vector<1x1x1x128xf32> to vector<1x128xf32>
      %cst_36 = arith.constant dense<0x7F800000> : vector<128xf32>
      %66 = vector.multi_reduction <minimumf>, %62, %cst_36 [0] : vector<32x128xf32> to vector<128xf32>
      %67 = vector.shape_cast %66 : vector<128xf32> to vector<1x128xf32>
      %68 = arith.minimumf %65, %67 : vector<1x128xf32>
      %c0_37 = arith.constant 0 : index
      %c0_38 = arith.constant 0 : index
      %c0_39 = arith.constant 0 : index
      %69 = arith.index_cast %58 : i32 to index
      %70 = vector.load %arg5[%c0_37, %c0_38, %c0_39, %69] : memref<1x1x1x256xf32, #tpu.memory_space<vmem>>, vector<1x1x1x128xf32>
      %71 = vector.shape_cast %70 : vector<1x1x1x128xf32> to vector<1x128xf32>
      %72 = vector.shape_cast %68 : vector<1x128xf32> to vector<1x1x1x128xf32>
      tpu.vector_store %arg5[%c0_37, %c0_38, %c0_39, %69], %72 {strides = array<i32>} : memref<1x1x1x256xf32, #tpu.memory_space<vmem>>, vector<1x1x1x128xf32>,
      %cst_40 = arith.constant dense<0x7F800000> : vector<32xf32>
      %73 = vector.multi_reduction <minimumf>, %62, %cst_40 [1] : vector<32x128xf32> to vector<32xf32>
      %74 = vector.shape_cast %73 : vector<32xf32> to vector<32x1xf32>
      %75 = arith.minimumf %arg7, %74 : vector<32x1xf32>
      scf.yield %75 : vector<32x1xf32>
    }
    %c2_i32_8 = arith.constant 2 : i32
    %12 = tpu.iota {dimensions = array<i32: 0>} : vector<32x1xi32>
    %13 = arith.addi %0, %5 : i32
    %14 = vector.broadcast %13 : i32 to vector<32x1xi32>
    %15 = arith.addi %12, %14 : vector<32x1xi32>
    %cst_9 = arith.constant 0.000000e+00 : f32
    %16 = vector.broadcast %cst_9 : f32 to vector<32x1xf32>
    %17 = arith.maximumf %11, %16 : vector<32x1xf32>
    %18 = math.sqrt %17 : vector<32x1xf32>
    %c160_i32 = arith.constant 160 : i32
    %19 = vector.broadcast %c160_i32 : i32 to vector<32x1xi32>
    %20 = arith.cmpi slt, %15, %19 : vector<32x1xi32>
    %cst_10 = arith.constant 0.000000e+00 : f32
    %21 = vector.broadcast %cst_10 : f32 to vector<32x1xf32>
    %22 = arith.select %20, %18, %21 : vector<32x1xi1>, vector<32x1xf32>
    %23 = vector.shape_cast %22 : vector<32x1xf32> to vector<1x32x1xf32>
    %cst_11 = arith.constant dense<0.000000e+00> : vector<1xf32>
    %24 = vector.multi_reduction <add>, %23, %cst_11 [1, 2] : vector<1x32x1xf32> to vector<1xf32>
    %25 = vector.shape_cast %24 : vector<1xf32> to vector<1x1x1xf32>
    %26 = vector.extract %25[0, 0, 0] : f32 from vector<1x1x1xf32>
    %27 = vector.broadcast %26 : f32 to vector<1x1xf32>
    %28 = arith.addf %3, %27 : vector<1x1xf32>
    %c1_i32_12 = arith.constant 1 : i32
    %c32_i32_13 = arith.constant 32 : i32
    %29 = arith.muli %c1_i32_12, %c32_i32_13 : i32
    %30 = tpu.assume_multiple %29, 8 : i32
    %c0_14 = arith.constant 0 : index
    %31 = arith.index_cast %30 : i32 to index
    %c0_15 = arith.constant 0 : index
    %32 = vector.load %arg2[%c0_14, %31, %c0_15] : memref<1x64x8xf32, #tpu.memory_space<vmem>>, vector<1x32x8xf32>
    %33 = vector.shape_cast %32 : vector<1x32x8xf32> to vector<32x8xf32>
    %cst_16 = arith.constant 1.000000e+30 : f32
    %34 = vector.broadcast %cst_16 : f32 to vector<32x1xf32>
    %c0_i32_17 = arith.constant 0 : i32
    %c2_i32_18 = arith.constant 2 : i32
    %35 = arith.addi %c0_i32_17, %c2_i32_18 : i32
    %c1_i32_19 = arith.constant 1 : i32
    %36 = scf.for %arg6 = %c0_i32_17 to %35 step %c1_i32_19 iter_args(%arg7 = %34) -> (vector<32x1xf32>)  : i32 {
      %c128_i32 = arith.constant 128 : i32
      %57 = arith.muli %arg6, %c128_i32 : i32
      %58 = tpu.assume_multiple %57, 128 : i32
      %c0_30 = arith.constant 0 : index
      %c0_31 = arith.constant 0 : index
      %59 = arith.index_cast %58 : i32 to index
      %60 = vector.load %arg3[%c0_30, %c0_31, %59] : memref<1x8x256xf32, #tpu.memory_space<vmem>>, vector<1x8x128xf32>
      %61 = vector.shape_cast %60 : vector<1x8x128xf32> to vector<8x128xf32>
      %cst_32 = arith.constant dense<0.000000e+00> : vector<32x128xf32>
      %62 = tpu.matmul %33, %61, %cst_32 {dimension_numbers = #tpu.dot_dimension_numbers<[1], [0], [0], [1], [0, 0, 1, 1], [], []>, precision = #tpu.contract_precision<fp32>} : vector<32x8xf32>, vector<8x128xf32>, vector<32x128xf32> -> vector<32x128xf32>
      %c0_33 = arith.constant 0 : index
      %c0_34 = arith.constant 0 : index
      %c0_35 = arith.constant 0 : index
      %63 = arith.index_cast %58 : i32 to index
      %64 = vector.load %arg5[%c0_33, %c0_34, %c0_35, %63] : memref<1x1x1x256xf32, #tpu.memory_space<vmem>>, vector<1x1x1x128xf32>
      %65 = vector.shape_cast %64 : vector<1x1x1x128xf32> to vector<1x128xf32>
      %cst_36 = arith.constant dense<0x7F800000> : vector<128xf32>
      %66 = vector.multi_reduction <minimumf>, %62, %cst_36 [0] : vector<32x128xf32> to vector<128xf32>
      %67 = vector.shape_cast %66 : vector<128xf32> to vector<1x128xf32>
      %68 = arith.minimumf %65, %67 : vector<1x128xf32>
      %c0_37 = arith.constant 0 : index
      %c0_38 = arith.constant 0 : index
      %c0_39 = arith.constant 0 : index
      %69 = arith.index_cast %58 : i32 to index
      %70 = vector.load %arg5[%c0_37, %c0_38, %c0_39, %69] : memref<1x1x1x256xf32, #tpu.memory_space<vmem>>, vector<1x1x1x128xf32>
      %71 = vector.shape_cast %70 : vector<1x1x1x128xf32> to vector<1x128xf32>
      %72 = vector.shape_cast %68 : vector<1x128xf32> to vector<1x1x1x128xf32>
      tpu.vector_store %arg5[%c0_37, %c0_38, %c0_39, %69], %72 {strides = array<i32>} : memref<1x1x1x256xf32, #tpu.memory_space<vmem>>, vector<1x1x1x128xf32>,
      %cst_40 = arith.constant dense<0x7F800000> : vector<32xf32>
      %73 = vector.multi_reduction <minimumf>, %62, %cst_40 [1] : vector<32x128xf32> to vector<32xf32>
      %74 = vector.shape_cast %73 : vector<32xf32> to vector<32x1xf32>
      %75 = arith.minimumf %arg7, %74 : vector<32x1xf32>
      scf.yield %75 : vector<32x1xf32>
    }
    %c2_i32_20 = arith.constant 2 : i32
    %37 = tpu.iota {dimensions = array<i32: 0>} : vector<32x1xi32>
    %38 = arith.addi %0, %30 : i32
    %39 = vector.broadcast %38 : i32 to vector<32x1xi32>
    %40 = arith.addi %37, %39 : vector<32x1xi32>
    %cst_21 = arith.constant 0.000000e+00 : f32
    %41 = vector.broadcast %cst_21 : f32 to vector<32x1xf32>
    %42 = arith.maximumf %36, %41 : vector<32x1xf32>
    %43 = math.sqrt %42 : vector<32x1xf32>
    %c160_i32_22 = arith.constant 160 : i32
    %44 = vector.broadcast %c160_i32_22 : i32 to vector<32x1xi32>
    %45 = arith.cmpi slt, %40, %44 : vector<32x1xi32>
    %cst_23 = arith.constant 0.000000e+00 : f32
    %46 = vector.broadcast %cst_23 : f32 to vector<32x1xf32>
    %47 = arith.select %45, %43, %46 : vector<32x1xi1>, vector<32x1xf32>
    %48 = vector.shape_cast %47 : vector<32x1xf32> to vector<1x32x1xf32>
    %cst_24 = arith.constant dense<0.000000e+00> : vector<1xf32>
    %49 = vector.multi_reduction <add>, %48, %cst_24 [1, 2] : vector<1x32x1xf32> to vector<1xf32>
    %50 = vector.shape_cast %49 : vector<1xf32> to vector<1x1x1xf32>
    %51 = vector.extract %50[0, 0, 0] : f32 from vector<1x1x1xf32>
    %52 = vector.broadcast %51 : f32 to vector<1x1xf32>
    %53 = arith.addf %28, %52 : vector<1x1xf32>
    %c2_i32_25 = arith.constant 2 : i32
    %c0_26 = arith.constant 0 : index
    %c0_27 = arith.constant 0 : index
    %c0_28 = arith.constant 0 : index
    %c0_29 = arith.constant 0 : index
    %54 = vector.load %arg4[%c0_26, %c0_27, %c0_28, %c0_29] : memref<1x1x1x1xf32, #tpu.memory_space<vmem>>, vector<1x1x1x1xf32>
    %55 = vector.shape_cast %54 : vector<1x1x1x1xf32> to vector<1x1xf32>
    %56 = vector.shape_cast %53 : vector<1x1xf32> to vector<1x1x1x1xf32>
    tpu.vector_store %arg4[%c0_26, %c0_27, %c0_28, %c0_29], %56 {strides = array<i32>} : memref<1x1x1x1xf32, #tpu.memory_space<vmem>>, vector<1x1x1x1xf32>,
    return
  }
  func.func @transform_0(%arg0: i32, %arg1: i32) -> (i32, i32, i32) {
    %c0_i32 = arith.constant 0 : i32
    %c0_i32_0 = arith.constant 0 : i32
    return %arg0, %arg1, %c0_i32 : i32, i32, i32
  }
  func.func @transform_1(%arg0: i32, %arg1: i32) -> (i32, i32, i32) {
    %c0_i32 = arith.constant 0 : i32
    %c0_i32_0 = arith.constant 0 : i32
    %c0_i32_1 = arith.constant 0 : i32
    return %arg0, %c0_i32, %c0_i32_0 : i32, i32, i32
  }
  func.func @transform_2(%arg0: i32, %arg1: i32) -> (i32, i32, i32, i32) {
    %c0_i32 = arith.constant 0 : i32
    %c0_i32_0 = arith.constant 0 : i32
    %c0_i32_1 = arith.constant 0 : i32
    return %arg0, %arg1, %c0_i32, %c0_i32_0 : i32, i32, i32, i32
  }
  func.func @transform_3(%arg0: i32, %arg1: i32) -> (i32, i32, i32, i32) {
    %c0_i32 = arith.constant 0 : i32
    %c0_i32_0 = arith.constant 0 : i32
    %c0_i32_1 = arith.constant 0 : i32
    return %arg0, %arg1, %c0_i32, %c0_i32_0 : i32, i32, i32, i32
  }
}

</mosaic_0001>

<llo_original>
// kernel: tpu_custom_call.1
$region0: #{tpu_custom_call.1}
  #allocation0 [shape = 'u32[]', space=smem, size = 0x4, offset = 0x4, fixed_abs, tag = 'smem constant byte address 0x4 - core index']
  #allocation1 [shape = 'u32[144,128]{1,0:T(1,128)}', space=vmem, size = 0x12000, scoped, tag = 'internal scratch']
  %s0 = inlined_call_operand.vmem [shape: f32[2,192,8], index: 0, kind: input, shape index: {}]
  %s1 = inlined_call_operand.vmem [shape: f32[2,8,256], index: 1, kind: input, shape index: {}]
  %s2 = inlined_call_operand.vmem [shape: f32[2,3,1,1], index: 2, kind: output, shape index: {0}]
  %s3 = inlined_call_operand.hbm [shape: f32[2,3,1,256], index: 3, kind: output, shape index: {1}]
  %4 = xla_tuple %s2, %s3
  %s5 = sld [smem:[#allocation0]]
  $region63: #{tpu_custom_call.1} parent=0
    _
  %s7 = ssub.s32 1, %s5
  %s8 = scalar_select 0, %s7, %s5
  $region1: #{tpu_custom_call.1} parent=0
    #allocation2 [shape = 'u8[2048]{0}', space=vmem, size = 0x800, scoped, tag = 'output window, operand 1']
    #allocation3 [shape = 's32[2]{0}', space=sflag, size = 0x8, scoped, tag = 'scoped memory for tpu_custom_call.1']
    %9 = vsyncpa [#allocation3], 0
    %s10 = scalar_lea.sflag [#allocation3], 1
    %11 = vsyncpa %s10, 0
    loop: start=0, step=1, limit=8
    $region2: #{tpu_custom_call.1} parent=1 // loop_pre_header
      _
    $region3: #{tpu_custom_call.1} parent=1 // loop_header
      %s13 = sphi 0, %s17
      %p14 = scmp.ge.s32.totalorder %s13, 8
      %s20 = sphi 0, %s32
      %s21 = sphi 0, %s28
      %s22 = sphi 0, %s20
      %s23 = sphi 0, %s21
      %s24 = sphi 0, %s22
      %s25 = sphi 0, %s23
      %s37 = sphi 0, %s39
      %s40 = sphi 0, %s37
      %s41 = sphi 0, %s40
      %s57 = sphi 0, %s41
      %s63 = sphi 0, %s65
      %s66 = sphi 0, %s63
      %s67 = sphi 0, %s66
      %s83 = sphi 0, %s67
      %s91 = sphi 0, %s93
      %s94 = sphi 0, %s91
      %s95 = sphi 0, %s94
      %s111 = sphi 0, %s95
      %s119 = sphi 0, %s121
      %s122 = sphi 0, %s119
      %s123 = sphi 0, %s122
      %s139 = sphi 0, %s123
    $region4: #{tpu_custom_call.1} parent=1 // loop_header_branch
      %16 = sbr.rel (%p14) target = $region8
    $region5: #{tpu_custom_call.1} parent=1 // loop_body
      %s18 = ssub.s32 %s13, 1
      %s19 = ssub.s32 %s13, 2
      %s26 = sadd.s32 1, %s21
      %p27 = scmp.ge.s32.totalorder %s26, 3
      %s28 = scalar_select %p27, 0, %s26
      %s29 = sadd.s32 1, %s20
      %s30 = scalar_select %p27, %s29, %s20
      %p31 = scmp.ge.s32.totalorder %s30, 2
      %s32 = scalar_select %p31, 0, %s30
      %s33 = ssub.s32 %s20, %s32
      %s34 = ssub.s32 %s21, %s28
      %s35 = sor.u32 %s33, %s34
      %p36 = scmp.eq.s32.totalorder %s35, 0
      %s38 = sadd.s32 %s37, 1
      %s39 = scalar_select %p36, %s37, %s38
      %p42 = pneg %p36
      %p43 = scmp.eq.s32.totalorder %s13, 5
      %p44 = por %p42, %p43
      %p45 = scmp.ne.s32.totalorder %s37, %s40
      %p46 = scmp.eq.s32.totalorder %s13, 0
      %p47 = por %p45, %p46
      %p48 = scmp.ne.s32.totalorder %s37, %s40
      %p49 = scmp.eq.s32.totalorder %s18, 5
      %p50 = por %p48, %p49
      %p51 = scmp.ne.s32.totalorder %s40, %s41
      %p52 = scmp.eq.s32.totalorder %s18, 0
      %p53 = por %p51, %p52
      %p54 = scmp.ne.s32.totalorder %s40, %s41
      %p55 = scmp.eq.s32.totalorder %s19, 5
      %p56 = por %p54, %p55
      %p58 = scmp.ne.s32.totalorder %s41, %s57
      %p59 = scmp.eq.s32.totalorder %s19, 0
      %p60 = por %p58, %p59
      %s61 = ssub.s32 %s20, %s32
      %p62 = scmp.eq.s32.totalorder %s61, 0
      %s64 = sadd.s32 %s63, 1
      %s65 = scalar_select %p62, %s63, %s64
      %p68 = pneg %p62
      %p69 = scmp.eq.s32.totalorder %s13, 5
      %p70 = por %p68, %p69
      %p71 = scmp.ne.s32.totalorder %s63, %s66
      %p72 = scmp.eq.s32.totalorder %s13, 0
      %p73 = por %p71, %p72
      %p74 = scmp.ne.s32.totalorder %s63, %s66
      %p75 = scmp.eq.s32.totalorder %s18, 5
      %p76 = por %p74, %p75
      %p77 = scmp.ne.s32.totalorder %s66, %s67
      %p78 = scmp.eq.s32.totalorder %s18, 0
      %p79 = por %p77, %p78
      %p80 = scmp.ne.s32.totalorder %s66, %s67
      %p81 = scmp.eq.s32.totalorder %s19, 5
      %p82 = por %p80, %p81
      %p84 = scmp.ne.s32.totalorder %s67, %s83
      %p85 = scmp.eq.s32.totalorder %s19, 0
      %p86 = por %p84, %p85
      %s87 = ssub.s32 %s20, %s32
      %s88 = ssub.s32 %s21, %s28
      %s89 = sor.u32 %s87, %s88
      %p90 = scmp.eq.s32.totalorder %s89, 0
      %s92 = sadd.s32 %s91, 1
      %s93 = scalar_select %p90, %s91, %s92
      %p96 = pneg %p90
      %p97 = scmp.eq.s32.totalorder %s13, 5
      %p98 = por %p96, %p97
      %p99 = scmp.ne.s32.totalorder %s91, %s94
      %p100 = scmp.eq.s32.totalorder %s13, 0
      %p101 = por %p99, %p100
      %p102 = scmp.ne.s32.totalorder %s91, %s94
      %p103 = scmp.eq.s32.totalorder %s18, 5
      %p104 = por %p102, %p103
      %p105 = scmp.ne.s32.totalorder %s94, %s95
      %p106 = scmp.eq.s32.totalorder %s18, 0
      %p107 = por %p105, %p106
      %p108 = scmp.ne.s32.totalorder %s94, %s95
      %p109 = scmp.eq.s32.totalorder %s19, 5
      %p110 = por %p108, %p109
      %p112 = scmp.ne.s32.totalorder %s95, %s111
      %p113 = scmp.eq.s32.totalorder %s19, 0
      %p114 = por %p112, %p113
      %s115 = ssub.s32 %s20, %s32
      %s116 = ssub.s32 %s21, %s28
      %s117 = sor.u32 %s115, %s116
      %p118 = scmp.eq.s32.totalorder %s117, 0
      %s120 = sadd.s32 %s119, 1
      %s121 = scalar_select %p118, %s119, %s120
      %p124 = pneg %p118
      %p125 = scmp.eq.s32.totalorder %s13, 5
      %p126 = por %p124, %p125
      %p127 = scmp.ne.s32.totalorder %s119, %s122
      %p128 = scmp.eq.s32.totalorder %s13, 0
      %p129 = por %p127, %p128
      %p130 = scmp.ne.s32.totalorder %s119, %s122
      %p131 = scmp.eq.s32.totalorder %s18, 5
      %p132 = por %p130, %p131
      %p133 = scmp.ne.s32.totalorder %s122, %s123
      %p134 = scmp.eq.s32.totalorder %s18, 0
      %p135 = por %p133, %p134
      %p136 = scmp.ne.s32.totalorder %s122, %s123
      %p137 = scmp.eq.s32.totalorder %s19, 5
      %p138 = por %p136, %p137
      %p140 = scmp.ne.s32.totalorder %s123, %s139
      %p141 = scmp.eq.s32.totalorder %s19, 0
      %p142 = por %p140, %p141
      %p143 = scmp.le.s32.totalorder 1, %s13
      %p144 = scmp.lt.s32.totalorder %s13, 7
      %p145 = pnand %p143, %p144
      %p146 = pneg %p145
      // Predicated region
      $region9: #{tpu_custom_call.1} parent=5 // pred_check
        _
      $region10: #{tpu_custom_call.1} parent=5 // pred_check_branch
        %148 = sbr.rel (%p145) target = $region12
      $region11: #{tpu_custom_call.1} parent=5 // pred_region
        %s149 = ssub.s32 %s13, 1
      $region12: #{tpu_custom_call.1} parent=5 // pred_fallthru
        _
      %p150 = scmp.lt.s32.totalorder %s13, 6
      // Predicated region
      $region13: #{tpu_custom_call.1} parent=5 // pred_check
        %p151 = pneg %p150
      $region14: #{tpu_custom_call.1} parent=5 // pred_check_branch
        %153 = sbr.rel (%p151) target = $region16
      $region15: #{tpu_custom_call.1} parent=5 // pred_region
        // Predicated region
        $region17: #{tpu_custom_call.1} parent=15 // pred_check
          %p154 = pneg %p47
        $region18: #{tpu_custom_call.1} parent=15 // pred_check_branch
          %156 = sbr.rel (%p154) target = $region20
        $region19: #{tpu_custom_call.1} parent=15 // pred_region
          %s157 = smul.u32 8, %s21
          %p158 = scmp.lt.s32.totalorder %s20, 1
          %s159 = scalar_select %p158, %s20, 1
          %p160 = scmp.lt.s32.totalorder %s157, 23
          %s161 = scalar_select %p160, %s157, 23
          %s162 = smul.addr %s159, 24
          %s163 = sadd.s32 %s161, %s162
          %s164 = smul.addr %s163, 8
          %s165 = scalar_lea.vmem %s0, %s164
          %s166 = smul.u32 8, %s21
        $region20: #{tpu_custom_call.1} parent=15 // pred_fallthru
          _
        // Predicated region
        $region21: #{tpu_custom_call.1} parent=15 // pred_check
          %p167 = pneg %p73
        $region22: #{tpu_custom_call.1} parent=15 // pred_check_branch
          %169 = sbr.rel (%p167) target = $region24
        $region23: #{tpu_custom_call.1} parent=15 // pred_region
          %p170 = scmp.lt.s32.totalorder %s20, 1
          %s171 = scalar_select %p170, %s20, 1
          %s172 = smul.addr %s171, 2
          %s173 = smul.addr %s172, 8
          %s174 = scalar_lea.vmem %s1, %s173
        $region24: #{tpu_custom_call.1} parent=15 // pred_fallthru
          _
      $region16: #{tpu_custom_call.1} parent=5 // pred_fallthru
        _
      %p175 = scmp.le.s32.totalorder 1, %s13
      %p176 = scmp.lt.s32.totalorder %s13, 7
      %p177 = pnand %p175, %p176
      %p178 = pneg %p177
      // Predicated region
      $region25: #{tpu_custom_call.1} parent=5 // pred_check
        _
      $region26: #{tpu_custom_call.1} parent=5 // pred_check_branch
        %180 = sbr.rel (%p177) target = $region28
      $region27: #{tpu_custom_call.1} parent=5 // pred_region
        %s181 = ssub.s32 %s13, 1
        %s182 = smul.u32 8, %s23
        %p183 = scmp.lt.s32.totalorder %s22, 1
        %s184 = scalar_select %p183, %s22, 1
        %p185 = scmp.lt.s32.totalorder %s182, 23
        %s186 = scalar_select %p185, %s182, 23
        %s187 = smul.addr %s184, 24
        %s188 = sadd.s32 %s186, %s187
        %s189 = smul.addr %s188, 8
        %s190 = scalar_lea.vmem %s0, %s189
        %p191 = pneg %p53
        %p192 = pneg %p50
        %p193 = scmp.lt.s32.totalorder %s22, 1
        %s194 = scalar_select %p193, %s22, 1
        %s195 = smul.addr %s194, 2
        %s196 = smul.addr %s195, 8
        %s197 = scalar_lea.vmem %s1, %s196
        %p198 = pneg %p79
        %p199 = pneg %p76
        %p200 = pneg %p107
        %p201 = pneg %p104
        %p202 = scmp.lt.s32.totalorder %s22, 1
        %s203 = scalar_select %p202, %s22, 1
        %p204 = scmp.lt.s32.totalorder %s23, 2
        %s205 = scalar_select %p204, %s23, 2
        %s206 = smul.addr %s203, 3
        %s207 = sadd.s32 %s205, %s206
        %s208 = scalar_lea.vmem %s2, %s207
        %p209 = pneg %p135
        %p210 = pneg %p132
        %s211 = sand.u32 %s122, 1
        %s212 = scalar_lea.sflag [#allocation3], %s211
        %s213 = sand.u32 %s122, 1
        %s214 = smul.addr %s213, 2
        %s215 = scalar_lea.vmem [#allocation2], %s214
        %s216 = smul.u32 8, %s23
        %p217 = scmp.lt.s32.totalorder %s22, 1
        %s218 = scalar_select %p217, %s22, 1
        %p219 = scmp.lt.s32.totalorder %s216, 23
        %s220 = scalar_select %p219, %s216, 23
        %s221 = smul.addr %s218, 24
        %s222 = sadd.s32 %s220, %s221
        %s223 = smul.addr %s222, 8
        %s224 = scalar_lea.vmem %s0, %s223
        %s225 = smul.u32 8, %s23
        %p226 = scmp.lt.s32.totalorder %s22, 1
        %s227 = scalar_select %p226, %s22, 1
        %s228 = smul.addr %s227, 2
        %s229 = smul.addr %s228, 8
        %s230 = scalar_lea.vmem %s1, %s229
        %p231 = scmp.lt.s32.totalorder %s22, 1
        %s232 = scalar_select %p231, %s22, 1
        %p233 = scmp.lt.s32.totalorder %s23, 2
        %s234 = scalar_select %p233, %s23, 2
        %s235 = smul.addr %s232, 3
        %s236 = sadd.s32 %s234, %s235
        %s237 = scalar_lea.vmem %s2, %s236
        %s238 = smul.u32 %s23, 64
        %v239 = vlaneseq
        %vm240 = vcmp.ge.s32.totalorder %v239, 0
        %vm241 = vcmp.lt.s32.totalorder %v239, 256
        %vm242 = vmand %vm240, %vm241
        %243 = vst.msk [vmem:[%s215] sm:$0x3] %vm242, 1e+30
        %v244 = vld [vmem:[%s224] sm:$0xff]
        %v245 = vld [vmem:[%s224 + $0x8] sm:$0xff]
        %v246 = vld [vmem:[%s224 + $0x10] sm:$0xff]
        %v247 = vld [vmem:[%s224 + $0x18] sm:$0xff]
        loop: start=0, step=1, limit=2
        $region29: #{tpu_custom_call.1} parent=27 // loop_pre_header
          _
        $region30: #{tpu_custom_call.1} parent=27 // loop_header
          %s249 = sphi 0, %s253
          %p250 = scmp.ge.s32.totalorder %s249, 2
          %v254 = vphi 1e+30, %v875
          %v255 = vphi 1e+30, %v876
          %v256 = vphi 1e+30, %v877
          %v257 = vphi 1e+30, %v878
        $region31: #{tpu_custom_call.1} parent=27 // loop_header_branch
          %252 = sbr.rel (%p250) target = $region35
        $region32: #{tpu_custom_call.1} parent=27 // loop_body
          %s258 = smul.u32 %s249, 128
          %s259 = sshra.s32 %s258, 7
          %s260 = sand.u32 %s258, 127
          %s261 = smul.addr %s259, 8
          %s262 = scalar_lea.vmem %s230, %s261
          %v263 = vld [vmem:[%s262] sm:$0xff]
          %vm264 = vcmask 64512
          %v266 = vsel %vm264, %v244, 0
          %v269 = vsel %vm264, %v245, 0
          %v272 = vsel %vm264, %v246, 0
          %v275 = vsel %vm264, %v247, 0
          %277 = vmatprep.subr.mxu0 0.0
          %v278 = vand.u32 %v263, 4294901760
          %279 = vmatpush1.msra.mxu0 %v278
          %280 = vmatprep.subr.mxu0 0.0
          %281 = vmatpush1.msra.mxu0 0.0
          %282 = vmatprep.subr.mxu0 0.0
          %283 = vmatpush1.msra.mxu0 0.0
          %284 = vmatprep.subr.mxu0 0.0
          %285 = vmatpush1.msra.mxu0 0.0
          %286 = vmatprep.subr.mxu0 0.0
          %287 = vmatpush1.msra.mxu0 0.0
          %288 = vmatprep.subr.mxu0 0.0
          %289 = vmatpush1.msra.mxu0 0.0
          %290 = vmatprep.subr.mxu0 0.0
          %291 = vmatpush1.msra.mxu0 0.0
          %292 = vmatprep.subr.mxu0 0.0
          %293 = vmatpush1.msra.mxu0 0.0
          %294 = vmatprep.subr.mxu0 0.0
          %295 = vmatpush1.msra.mxu0 0.0
          %296 = vmatprep.subr.mxu0 0.0
          %297 = vmatpush1.msra.mxu0 0.0
          %298 = vmatprep.subr.mxu0 0.0
          %299 = vmatpush1.msra.mxu0 0.0
          %300 = vmatprep.subr.mxu0 0.0
          %301 = vmatpush1.msra.mxu0 0.0
          %302 = vmatprep.subr.mxu0 0.0
          %303 = vmatpush1.msra.mxu0 0.0
          %304 = vmatprep.subr.mxu0 0.0
          %305 = vmatpush1.msra.mxu0 0.0
          %306 = vmatprep.subr.mxu0 0.0
          %307 = vmatpush1.msra.mxu0 0.0
          %308 = vmatprep.subr.mxu0 0.0
          %309 = vmatpush1.msra.mxu0 0.0
          %310 = vmatprep.subr.mxu0 0.0
          %311 = vmatpush1.msra.mxu0 0.0
          %312 = vmatprep.subr.mxu0 0.0
          %313 = vmatpush1.msra.mxu0 0.0
          %314 = vmatprep.subr.mxu0 0.0
          %315 = vmatpush1.msra.mxu0 0.0
          %316 = vmatprep.subr.mxu0 0.0
          %317 = vmatpush1.msra.mxu0 0.0
          %318 = vmatprep.subr.mxu0 0.0
          %319 = vmatpush1.msra.mxu0 0.0
          %320 = vmatprep.subr.mxu0 0.0
          %321 = vmatpush1.msra.mxu0 0.0
          %322 = vmatprep.subr.mxu0 0.0
          %323 = vmatpush1.msra.mxu0 0.0
          %324 = vmatprep.subr.mxu0 0.0
          %325 = vmatpush1.msra.mxu0 0.0
          %326 = vmatprep.subr.mxu0 0.0
          %327 = vmatpush1.msra.mxu0 0.0
          %328 = vmatprep.subr.mxu0 0.0
          %329 = vmatpush1.msra.mxu0 0.0
          %330 = vmatprep.subr.mxu0 0.0
          %331 = vmatpush1.msra.mxu0 0.0
          %332 = vmatprep.subr.mxu0 0.0
          %333 = vmatpush1.msra.mxu0 0.0
          %334 = vmatprep.subr.mxu0 0.0
          %335 = vmatpush1.msra.mxu0 0.0
          %336 = vmatprep.subr.mxu0 0.0
          %337 = vmatpush1.msra.mxu0 0.0
          %338 = vmatprep.subr.mxu0 0.0
          %339 = vmatpush1.msra.mxu0 0.0
          %340 = vmatprep.subr.mxu0 0.0
          %341 = vmatpush1.msra.mxu0 0.0
          %342 = vmatprep.mubr.f32.mxu0 0.0
          %v343 = vand.u32 %v266, 4294901760
          %v344 = vsub.f32 %v266, %v343
          %v345 = vand.u32 %v344, 4294901760
          %v346 = vsub.f32 %v344, %v345
          %v347 = vand.u32 %v346, 4294901760
          %348 = vmatmul.mubr.f32.gmra.mrb[0].mxu0 %v347
          %v349 = vpop.f32.mrb[0].mxu0
          %v350 = vadd.f32 0.0, %v349
          %v351 = vpop.f32.mrb[0].mxu0
          %352 = vmatprep.mubr.f32.mxu0 0.0
          %v353 = vand.u32 %v269, 4294901760
          %v354 = vsub.f32 %v269, %v353
          %v355 = vand.u32 %v354, 4294901760
          %v356 = vsub.f32 %v354, %v355
          %v357 = vand.u32 %v356, 4294901760
          %358 = vmatmul.mubr.f32.gmra.mrb[0].mxu0 %v357
          %v359 = vpop.f32.mrb[0].mxu0
          %v360 = vadd.f32 0.0, %v359
          %v361 = vpop.f32.mrb[0].mxu0
          %362 = vmatprep.mubr.f32.mxu0 0.0
          %v363 = vand.u32 %v272, 4294901760
          %v364 = vsub.f32 %v272, %v363
          %v365 = vand.u32 %v364, 4294901760
          %v366 = vsub.f32 %v364, %v365
          %v367 = vand.u32 %v366, 4294901760
          %368 = vmatmul.mubr.f32.gmra.mrb[0].mxu0 %v367
          %v369 = vpop.f32.mrb[0].mxu0
          %v370 = vadd.f32 0.0, %v369
          %v371 = vpop.f32.mrb[0].mxu0
          %372 = vmatprep.mubr.f32.mxu0 0.0
          %v373 = vand.u32 %v275, 4294901760
          %v374 = vsub.f32 %v275, %v373
          %v375 = vand.u32 %v374, 4294901760
          %v376 = vsub.f32 %v374, %v375
          %v377 = vand.u32 %v376, 4294901760
          %378 = vmatmul.mubr.f32.gmra.mrb[0].mxu0 %v377
          %v379 = vpop.f32.mrb[0].mxu0
          %v380 = vadd.f32 0.0, %v379
          %v381 = vpop.f32.mrb[0].mxu0
          %382 = vdwg.mxu0
          %383 = vmatprep.subr.mxu0 0.0
          %v384 = vand.u32 %v263, 4294901760
          %v385 = vsub.f32 %v263, %v384
          %v386 = vand.u32 %v385, 4294901760
          %v387 = vsub.f32 %v385, %v386
          %v388 = vand.u32 %v387, 4294901760
          %389 = vmatpush1.msra.mxu0 %v388
          %390 = vmatprep.subr.mxu0 0.0
          %391 = vmatpush1.msra.mxu0 0.0
          %392 = vmatprep.subr.mxu0 0.0
          %393 = vmatpush1.msra.mxu0 0.0
          %394 = vmatprep.subr.mxu0 0.0
          %395 = vmatpush1.msra.mxu0 0.0
          %396 = vmatprep.subr.mxu0 0.0
          %397 = vmatpush1.msra.mxu0 0.0
          %398 = vmatprep.subr.mxu0 0.0
          %399 = vmatpush1.msra.mxu0 0.0
          %400 = vmatprep.subr.mxu0 0.0
          %401 = vmatpush1.msra.mxu0 0.0
          %402 = vmatprep.subr.mxu0 0.0
          %403 = vmatpush1.msra.mxu0 0.0
          %404 = vmatprep.subr.mxu0 0.0
          %405 = vmatpush1.msra.mxu0 0.0
          %406 = vmatprep.subr.mxu0 0.0
          %407 = vmatpush1.msra.mxu0 0.0
          %408 = vmatprep.subr.mxu0 0.0
          %409 = vmatpush1.msra.mxu0 0.0
          %410 = vmatprep.subr.mxu0 0.0
          %411 = vmatpush1.msra.mxu0 0.0
          %412 = vmatprep.subr.mxu0 0.0
          %413 = vmatpush1.msra.mxu0 0.0
          %414 = vmatprep.subr.mxu0 0.0
          %415 = vmatpush1.msra.mxu0 0.0
          %416 = vmatprep.subr.mxu0 0.0
          %417 = vmatpush1.msra.mxu0 0.0
          %418 = vmatprep.subr.mxu0 0.0
          %419 = vmatpush1.msra.mxu0 0.0
          %420 = vmatprep.subr.mxu0 0.0
          %421 = vmatpush1.msra.mxu0 0.0
          %422 = vmatprep.subr.mxu0 0.0
          %423 = vmatpush1.msra.mxu0 0.0
          %424 = vmatprep.subr.mxu0 0.0
          %425 = vmatpush1.msra.mxu0 0.0
          %426 = vmatprep.subr.mxu0 0.0
          %427 = vmatpush1.msra.mxu0 0.0
          %428 = vmatprep.subr.mxu0 0.0
          %429 = vmatpush1.msra.mxu0 0.0
          %430 = vmatprep.subr.mxu0 0.0
          %431 = vmatpush1.msra.mxu0 0.0
          %432 = vmatprep.subr.mxu0 0.0
          %433 = vmatpush1.msra.mxu0 0.0
          %434 = vmatprep.subr.mxu0 0.0
          %435 = vmatpush1.msra.mxu0 0.0
          %436 = vmatprep.subr.mxu0 0.0
          %437 = vmatpush1.msra.mxu0 0.0
          %438 = vmatprep.subr.mxu0 0.0
          %439 = vmatpush1.msra.mxu0 0.0
          %440 = vmatprep.subr.mxu0 0.0
          %441 = vmatpush1.msra.mxu0 0.0
          %442 = vmatprep.subr.mxu0 0.0
          %443 = vmatpush1.msra.mxu0 0.0
          %444 = vmatprep.subr.mxu0 0.0
          %445 = vmatpush1.msra.mxu0 0.0
          %446 = vmatprep.subr.mxu0 0.0
          %447 = vmatpush1.msra.mxu0 0.0
          %448 = vmatprep.subr.mxu0 0.0
          %449 = vmatpush1.msra.mxu0 0.0
          %450 = vmatprep.subr.mxu0 0.0
          %451 = vmatpush1.msra.mxu0 0.0
          %452 = vmatprep.mubr.f32.mxu0 0.0
          %v453 = vand.u32 %v266, 4294901760
          %454 = vmatmul.mubr.f32.gmra.mrb[0].mxu0 %v453
          %v455 = vpop.f32.mrb[0].mxu0
          %v456 = vadd.f32 %v350, %v455
          %v457 = vpop.f32.mrb[0].mxu0
          %458 = vmatprep.mubr.f32.mxu0 0.0
          %v459 = vand.u32 %v269, 4294901760
          %460 = vmatmul.mubr.f32.gmra.mrb[0].mxu0 %v459
          %v461 = vpop.f32.mrb[0].mxu0
          %v462 = vadd.f32 %v360, %v461
          %v463 = vpop.f32.mrb[0].mxu0
          %464 = vmatprep.mubr.f32.mxu0 0.0
          %v465 = vand.u32 %v272, 4294901760
          %466 = vmatmul.mubr.f32.gmra.mrb[0].mxu0 %v465
          %v467 = vpop.f32.mrb[0].mxu0
          %v468 = vadd.f32 %v370, %v467
          %v469 = vpop.f32.mrb[0].mxu0
          %470 = vmatprep.mubr.f32.mxu0 0.0
          %v471 = vand.u32 %v275, 4294901760
          %472 = vmatmul.mubr.f32.gmra.mrb[0].mxu0 %v471
          %v473 = vpop.f32.mrb[0].mxu0
          %v474 = vadd.f32 %v380, %v473
          %v475 = vpop.f32.mrb[0].mxu0
          %476 = vdwg.mxu0
          %477 = vmatprep.subr.mxu0 0.0
          %v478 = vand.u32 %v263, 4294901760
          %v479 = vsub.f32 %v263, %v478
          %480 = vmatpush1.msra.mxu0 %v479
          %481 = vmatprep.subr.mxu0 0.0
          %482 = vmatpush1.msra.mxu0 0.0
          %483 = vmatprep.subr.mxu0 0.0
          %484 = vmatpush1.msra.mxu0 0.0
          %485 = vmatprep.subr.mxu0 0.0
          %486 = vmatpush1.msra.mxu0 0.0
          %487 = vmatprep.subr.mxu0 0.0
          %488 = vmatpush1.msra.mxu0 0.0
          %489 = vmatprep.subr.mxu0 0.0
          %490 = vmatpush1.msra.mxu0 0.0
          %491 = vmatprep.subr.mxu0 0.0
          %492 = vmatpush1.msra.mxu0 0.0
          %493 = vmatprep.subr.mxu0 0.0
          %494 = vmatpush1.msra.mxu0 0.0
          %495 = vmatprep.subr.mxu0 0.0
          %496 = vmatpush1.msra.mxu0 0.0
          %497 = vmatprep.subr.mxu0 0.0
          %498 = vmatpush1.msra.mxu0 0.0
          %499 = vmatprep.subr.mxu0 0.0
          %500 = vmatpush1.msra.mxu0 0.0
          %501 = vmatprep.subr.mxu0 0.0
          %502 = vmatpush1.msra.mxu0 0.0
          %503 = vmatprep.subr.mxu0 0.0
          %504 = vmatpush1.msra.mxu0 0.0
          %505 = vmatprep.subr.mxu0 0.0
          %506 = vmatpush1.msra.mxu0 0.0
          %507 = vmatprep.subr.mxu0 0.0
          %508 = vmatpush1.msra.mxu0 0.0
          %509 = vmatprep.subr.mxu0 0.0
          %510 = vmatpush1.msra.mxu0 0.0
          %511 = vmatprep.subr.mxu0 0.0
          %512 = vmatpush1.msra.mxu0 0.0
          %513 = vmatprep.subr.mxu0 0.0
          %514 = vmatpush1.msra.mxu0 0.0
          %515 = vmatprep.subr.mxu0 0.0
          %516 = vmatpush1.msra.mxu0 0.0
          %517 = vmatprep.subr.mxu0 0.0
          %518 = vmatpush1.msra.mxu0 0.0
          %519 = vmatprep.subr.mxu0 0.0
          %520 = vmatpush1.msra.mxu0 0.0
          %521 = vmatprep.subr.mxu0 0.0
          %522 = vmatpush1.msra.mxu0 0.0
          %523 = vmatprep.subr.mxu0 0.0
          %524 = vmatpush1.msra.mxu0 0.0
          %525 = vmatprep.subr.mxu0 0.0
          %526 = vmatpush1.msra.mxu0 0.0
          %527 = vmatprep.subr.mxu0 0.0
          %528 = vmatpush1.msra.mxu0 0.0
          %529 = vmatprep.subr.mxu0 0.0
          %530 = vmatpush1.msra.mxu0 0.0
          %531 = vmatprep.subr.mxu0 0.0
          %532 = vmatpush1.msra.mxu0 0.0
          %533 = vmatprep.subr.mxu0 0.0
          %534 = vmatpush1.msra.mxu0 0.0
          %535 = vmatprep.subr.mxu0 0.0
          %536 = vmatpush1.msra.mxu0 0.0
          %537 = vmatprep.subr.mxu0 0.0
          %538 = vmatpush1.msra.mxu0 0.0
          %539 = vmatprep.subr.mxu0 0.0
          %540 = vmatpush1.msra.mxu0 0.0
          %541 = vmatprep.subr.mxu0 0.0
          %542 = vmatpush1.msra.mxu0 0.0
          %543 = vmatprep.mubr.f32.mxu0 0.0
          %v544 = vand.u32 %v266, 4294901760
          %v545 = vsub.f32 %v266, %v544
          %546 = vmatmul.mubr.f32.gmra.mrb[0].mxu0 %v545
          %v547 = vpop.f32.mrb[0].mxu0
          %v548 = vadd.f32 %v456, %v547
          %v549 = vpop.f32.mrb[0].mxu0
          %550 = vmatprep.mubr.f32.mxu0 0.0
          %v551 = vand.u32 %v269, 4294901760
          %v552 = vsub.f32 %v269, %v551
          %553 = vmatmul.mubr.f32.gmra.mrb[0].mxu0 %v552
          %v554 = vpop.f32.mrb[0].mxu0
          %v555 = vadd.f32 %v462, %v554
          %v556 = vpop.f32.mrb[0].mxu0
          %557 = vmatprep.mubr.f32.mxu0 0.0
          %v558 = vand.u32 %v272, 4294901760
          %v559 = vsub.f32 %v272, %v558
          %560 = vmatmul.mubr.f32.gmra.mrb[0].mxu0 %v559
          %v561 = vpop.f32.mrb[0].mxu0
          %v562 = vadd.f32 %v468, %v561
          %v563 = vpop.f32.mrb[0].mxu0
          %564 = vmatprep.mubr.f32.mxu0 0.0
          %v565 = vand.u32 %v275, 4294901760
          %v566 = vsub.f32 %v275, %v565
          %567 = vmatmul.mubr.f32.gmra.mrb[0].mxu0 %v566
          %v568 = vpop.f32.mrb[0].mxu0
          %v569 = vadd.f32 %v474, %v568
          %v570 = vpop.f32.mrb[0].mxu0
          %571 = vdwg.mxu0
          %572 = vmatprep.subr.mxu0 0.0
          %v573 = vand.u32 %v263, 4294901760
          %574 = vmatpush1.msra.mxu0 %v573
          %575 = vmatprep.subr.mxu0 0.0
          %576 = vmatpush1.msra.mxu0 0.0
          %577 = vmatprep.subr.mxu0 0.0
          %578 = vmatpush1.msra.mxu0 0.0
          %579 = vmatprep.subr.mxu0 0.0
          %580 = vmatpush1.msra.mxu0 0.0
          %581 = vmatprep.subr.mxu0 0.0
          %582 = vmatpush1.msra.mxu0 0.0
          %583 = vmatprep.subr.mxu0 0.0
          %584 = vmatpush1.msra.mxu0 0.0
          %585 = vmatprep.subr.mxu0 0.0
          %586 = vmatpush1.msra.mxu0 0.0
          %587 = vmatprep.subr.mxu0 0.0
          %588 = vmatpush1.msra.mxu0 0.0
          %589 = vmatprep.subr.mxu0 0.0
          %590 = vmatpush1.msra.mxu0 0.0
          %591 = vmatprep.subr.mxu0 0.0
          %592 = vmatpush1.msra.mxu0 0.0
          %593 = vmatprep.subr.mxu0 0.0
          %594 = vmatpush1.msra.mxu0 0.0
          %595 = vmatprep.subr.mxu0 0.0
          %596 = vmatpush1.msra.mxu0 0.0
          %597 = vmatprep.subr.mxu0 0.0
          %598 = vmatpush1.msra.mxu0 0.0
          %599 = vmatprep.subr.mxu0 0.0
          %600 = vmatpush1.msra.mxu0 0.0
          %601 = vmatprep.subr.mxu0 0.0
          %602 = vmatpush1.msra.mxu0 0.0
          %603 = vmatprep.subr.mxu0 0.0
          %604 = vmatpush1.msra.mxu0 0.0
          %605 = vmatprep.subr.mxu0 0.0
          %606 = vmatpush1.msra.mxu0 0.0
          %607 = vmatprep.subr.mxu0 0.0
          %608 = vmatpush1.msra.mxu0 0.0
          %609 = vmatprep.subr.mxu0 0.0
          %610 = vmatpush1.msra.mxu0 0.0
          %611 = vmatprep.subr.mxu0 0.0
          %612 = vmatpush1.msra.mxu0 0.0
          %613 = vmatprep.subr.mxu0 0.0
          %614 = vmatpush1.msra.mxu0 0.0
          %615 = vmatprep.subr.mxu0 0.0
          %616 = vmatpush1.msra.mxu0 0.0
          %617 = vmatprep.subr.mxu0 0.0
          %618 = vmatpush1.msra.mxu0 0.0
          %619 = vmatprep.subr.mxu0 0.0
          %620 = vmatpush1.msra.mxu0 0.0
          %621 = vmatprep.subr.mxu0 0.0
          %622 = vmatpush1.msra.mxu0 0.0
          %623 = vmatprep.subr.mxu0 0.0
          %624 = vmatpush1.msra.mxu0 0.0
          %625 = vmatprep.subr.mxu0 0.0
          %626 = vmatpush1.msra.mxu0 0.0
          %627 = vmatprep.subr.mxu0 0.0
          %628 = vmatpush1.msra.mxu0 0.0
          %629 = vmatprep.subr.mxu0 0.0
          %630 = vmatpush1.msra.mxu0 0.0
          %631 = vmatprep.subr.mxu0 0.0
          %632 = vmatpush1.msra.mxu0 0.0
          %633 = vmatprep.subr.mxu0 0.0
          %634 = vmatpush1.msra.mxu0 0.0
          %635 = vmatprep.subr.mxu0 0.0
          %636 = vmatpush1.msra.mxu0 0.0
          %637 = vmatprep.mubr.f32.mxu0 0.0
          %v638 = vand.u32 %v266, 4294901760
          %v639 = vsub.f32 %v266, %v638
          %v640 = vand.u32 %v639, 4294901760
          %641 = vmatmul.mubr.f32.gmra.mrb[0].mxu0 %v640
          %v642 = vpop.f32.mrb[0].mxu0
          %v643 = vadd.f32 %v548, %v642
          %v644 = vpop.f32.mrb[0].mxu0
          %645 = vmatprep.mubr.f32.mxu0 0.0
          %v646 = vand.u32 %v269, 4294901760
          %v647 = vsub.f32 %v269, %v646
          %v648 = vand.u32 %v647, 4294901760
          %649 = vmatmul.mubr.f32.gmra.mrb[0].mxu0 %v648
          %v650 = vpop.f32.mrb[0].mxu0
          %v651 = vadd.f32 %v555, %v650
          %v652 = vpop.f32.mrb[0].mxu0
          %653 = vmatprep.mubr.f32.mxu0 0.0
          %v654 = vand.u32 %v272, 4294901760
          %v655 = vsub.f32 %v272, %v654
          %v656 = vand.u32 %v655, 4294901760
          %657 = vmatmul.mubr.f32.gmra.mrb[0].mxu0 %v656
          %v658 = vpop.f32.mrb[0].mxu0
          %v659 = vadd.f32 %v562, %v658
          %v660 = vpop.f32.mrb[0].mxu0
          %661 = vmatprep.mubr.f32.mxu0 0.0
          %v662 = vand.u32 %v275, 4294901760
          %v663 = vsub.f32 %v275, %v662
          %v664 = vand.u32 %v663, 4294901760
          %665 = vmatmul.mubr.f32.gmra.mrb[0].mxu0 %v664
          %v666 = vpop.f32.mrb[0].mxu0
          %v667 = vadd.f32 %v569, %v666
          %v668 = vpop.f32.mrb[0].mxu0
          %669 = vdwg.mxu0
          %670 = vmatprep.subr.mxu0 0.0
          %v671 = vand.u32 %v263, 4294901760
          %v672 = vsub.f32 %v263, %v671
          %v673 = vand.u32 %v672, 4294901760
          %674 = vmatpush1.msra.mxu0 %v673
          %675 = vmatprep.subr.mxu0 0.0
          %676 = vmatpush1.msra.mxu0 0.0
          %677 = vmatprep.subr.mxu0 0.0
          %678 = vmatpush1.msra.mxu0 0.0
          %679 = vmatprep.subr.mxu0 0.0
          %680 = vmatpush1.msra.mxu0 0.0
          %681 = vmatprep.subr.mxu0 0.0
          %682 = vmatpush1.msra.mxu0 0.0
          %683 = vmatprep.subr.mxu0 0.0
          %684 = vmatpush1.msra.mxu0 0.0
          %685 = vmatprep.subr.mxu0 0.0
          %686 = vmatpush1.msra.mxu0 0.0
          %687 = vmatprep.subr.mxu0 0.0
          %688 = vmatpush1.msra.mxu0 0.0
          %689 = vmatprep.subr.mxu0 0.0
          %690 = vmatpush1.msra.mxu0 0.0
          %691 = vmatprep.subr.mxu0 0.0
          %692 = vmatpush1.msra.mxu0 0.0
          %693 = vmatprep.subr.mxu0 0.0
          %694 = vmatpush1.msra.mxu0 0.0
          %695 = vmatprep.subr.mxu0 0.0
          %696 = vmatpush1.msra.mxu0 0.0
          %697 = vmatprep.subr.mxu0 0.0
          %698 = vmatpush1.msra.mxu0 0.0
          %699 = vmatprep.subr.mxu0 0.0
          %700 = vmatpush1.msra.mxu0 0.0
          %701 = vmatprep.subr.mxu0 0.0
          %702 = vmatpush1.msra.mxu0 0.0
          %703 = vmatprep.subr.mxu0 0.0
          %704 = vmatpush1.msra.mxu0 0.0
          %705 = vmatprep.subr.mxu0 0.0
          %706 = vmatpush1.msra.mxu0 0.0
          %707 = vmatprep.subr.mxu0 0.0
          %708 = vmatpush1.msra.mxu0 0.0
          %709 = vmatprep.subr.mxu0 0.0
          %710 = vmatpush1.msra.mxu0 0.0
          %711 = vmatprep.subr.mxu0 0.0
          %712 = vmatpush1.msra.mxu0 0.0
          %713 = vmatprep.subr.mxu0 0.0
          %714 = vmatpush1.msra.mxu0 0.0
          %715 = vmatprep.subr.mxu0 0.0
          %716 = vmatpush1.msra.mxu0 0.0
          %717 = vmatprep.subr.mxu0 0.0
          %718 = vmatpush1.msra.mxu0 0.0
          %719 = vmatprep.subr.mxu0 0.0
          %720 = vmatpush1.msra.mxu0 0.0
          %721 = vmatprep.subr.mxu0 0.0
          %722 = vmatpush1.msra.mxu0 0.0
          %723 = vmatprep.subr.mxu0 0.0
          %724 = vmatpush1.msra.mxu0 0.0
          %725 = vmatprep.subr.mxu0 0.0
          %726 = vmatpush1.msra.mxu0 0.0
          %727 = vmatprep.subr.mxu0 0.0
          %728 = vmatpush1.msra.mxu0 0.0
          %729 = vmatprep.subr.mxu0 0.0
          %730 = vmatpush1.msra.mxu0 0.0
          %731 = vmatprep.subr.mxu0 0.0
          %732 = vmatpush1.msra.mxu0 0.0
          %733 = vmatprep.subr.mxu0 0.0
          %734 = vmatpush1.msra.mxu0 0.0
          %735 = vmatprep.subr.mxu0 0.0
          %736 = vmatpush1.msra.mxu0 0.0
          %737 = vmatprep.mubr.f32.mxu0 0.0
          %v738 = vand.u32 %v266, 4294901760
          %739 = vmatmul.mubr.f32.gmra.mrb[0].mxu0 %v738
          %v740 = vpop.f32.mrb[0].mxu0
          %v741 = vadd.f32 %v643, %v740
          %v742 = vpop.f32.mrb[0].mxu0
          %743 = vmatprep.mubr.f32.mxu0 0.0
          %v744 = vand.u32 %v269, 4294901760
          %745 = vmatmul.mubr.f32.gmra.mrb[0].mxu0 %v744
          %v746 = vpop.f32.mrb[0].mxu0
          %v747 = vadd.f32 %v651, %v746
          %v748 = vpop.f32.mrb[0].mxu0
          %749 = vmatprep.mubr.f32.mxu0 0.0
          %v750 = vand.u32 %v272, 4294901760
          %751 = vmatmul.mubr.f32.gmra.mrb[0].mxu0 %v750
          %v752 = vpop.f32.mrb[0].mxu0
          %v753 = vadd.f32 %v659, %v752
          %v754 = vpop.f32.mrb[0].mxu0
          %755 = vmatprep.mubr.f32.mxu0 0.0
          %v756 = vand.u32 %v275, 4294901760
          %757 = vmatmul.mubr.f32.gmra.mrb[0].mxu0 %v756
          %v758 = vpop.f32.mrb[0].mxu0
          %v759 = vadd.f32 %v667, %v758
          %v760 = vpop.f32.mrb[0].mxu0
          %761 = vdwg.mxu0
          %762 = vmatprep.subr.mxu0 0.0
          %v763 = vand.u32 %v263, 4294901760
          %764 = vmatpush1.msra.mxu0 %v763
          %765 = vmatprep.subr.mxu0 0.0
          %766 = vmatpush1.msra.mxu0 0.0
          %767 = vmatprep.subr.mxu0 0.0
          %768 = vmatpush1.msra.mxu0 0.0
          %769 = vmatprep.subr.mxu0 0.0
          %770 = vmatpush1.msra.mxu0 0.0
          %771 = vmatprep.subr.mxu0 0.0
          %772 = vmatpush1.msra.mxu0 0.0
          %773 = vmatprep.subr.mxu0 0.0
          %774 = vmatpush1.msra.mxu0 0.0
          %775 = vmatprep.subr.mxu0 0.0
          %776 = vmatpush1.msra.mxu0 0.0
          %777 = vmatprep.subr.mxu0 0.0
          %778 = vmatpush1.msra.mxu0 0.0
          %779 = vmatprep.subr.mxu0 0.0
          %780 = vmatpush1.msra.mxu0 0.0
          %781 = vmatprep.subr.mxu0 0.0
          %782 = vmatpush1.msra.mxu0 0.0
          %783 = vmatprep.subr.mxu0 0.0
          %784 = vmatpush1.msra.mxu0 0.0
          %785 = vmatprep.subr.mxu0 0.0
          %786 = vmatpush1.msra.mxu0 0.0
          %787 = vmatprep.subr.mxu0 0.0
          %788 = vmatpush1.msra.mxu0 0.0
          %789 = vmatprep.subr.mxu0 0.0
          %790 = vmatpush1.msra.mxu0 0.0
          %791 = vmatprep.subr.mxu0 0.0
          %792 = vmatpush1.msra.mxu0 0.0
          %793 = vmatprep.subr.mxu0 0.0
          %794 = vmatpush1.msra.mxu0 0.0
          %795 = vmatprep.subr.mxu0 0.0
          %796 = vmatpush1.msra.mxu0 0.0
          %797 = vmatprep.subr.mxu0 0.0
          %798 = vmatpush1.msra.mxu0 0.0
          %799 = vmatprep.subr.mxu0 0.0
          %800 = vmatpush1.msra.mxu0 0.0
          %801 = vmatprep.subr.mxu0 0.0
          %802 = vmatpush1.msra.mxu0 0.0
          %803 = vmatprep.subr.mxu0 0.0
          %804 = vmatpush1.msra.mxu0 0.0
          %805 = vmatprep.subr.mxu0 0.0
          %806 = vmatpush1.msra.mxu0 0.0
          %807 = vmatprep.subr.mxu0 0.0
          %808 = vmatpush1.msra.mxu0 0.0
          %809 = vmatprep.subr.mxu0 0.0
          %810 = vmatpush1.msra.mxu0 0.0
          %811 = vmatprep.subr.mxu0 0.0
          %812 = vmatpush1.msra.mxu0 0.0
          %813 = vmatprep.subr.mxu0 0.0
          %814 = vmatpush1.msra.mxu0 0.0
          %815 = vmatprep.subr.mxu0 0.0
          %816 = vmatpush1.msra.mxu0 0.0
          %817 = vmatprep.subr.mxu0 0.0
          %818 = vmatpush1.msra.mxu0 0.0
          %819 = vmatprep.subr.mxu0 0.0
          %820 = vmatpush1.msra.mxu0 0.0
          %821 = vmatprep.subr.mxu0 0.0
          %822 = vmatpush1.msra.mxu0 0.0
          %823 = vmatprep.subr.mxu0 0.0
          %824 = vmatpush1.msra.mxu0 0.0
          %825 = vmatprep.subr.mxu0 0.0
          %826 = vmatpush1.msra.mxu0 0.0
          %827 = vmatprep.mubr.f32.mxu0 0.0
          %v828 = vand.u32 %v266, 4294901760
          %829 = vmatmul.mubr.f32.gmra.mrb[0].mxu0 %v828
          %v830 = vpop.f32.mrb[0].mxu0
          %v831 = vadd.f32 %v741, %v830
          %v832 = vpop.f32.mrb[0].mxu0
          %833 = vmatprep.mubr.f32.mxu0 0.0
          %v834 = vand.u32 %v269, 4294901760
          %835 = vmatmul.mubr.f32.gmra.mrb[0].mxu0 %v834
          %v836 = vpop.f32.mrb[0].mxu0
          %v837 = vadd.f32 %v747, %v836
          %v838 = vpop.f32.mrb[0].mxu0
          %839 = vmatprep.mubr.f32.mxu0 0.0
          %v840 = vand.u32 %v272, 4294901760
          %841 = vmatmul.mubr.f32.gmra.mrb[0].mxu0 %v840
          %v842 = vpop.f32.mrb[0].mxu0
          %v843 = vadd.f32 %v753, %v842
          %v844 = vpop.f32.mrb[0].mxu0
          %845 = vmatprep.mubr.f32.mxu0 0.0
          %v846 = vand.u32 %v275, 4294901760
          %847 = vmatmul.mubr.f32.gmra.mrb[0].mxu0 %v846
          %v848 = vpop.f32.mrb[0].mxu0
          %v849 = vadd.f32 %v759, %v848
          %v850 = vpop.f32.mrb[0].mxu0
          %851 = vdwg.mxu0
          %s852 = scalar_lea.vmem %s215, %s259 [#allocation2]
          %v853 = vld [vmem:[%s852] sm:$0x1]
          %v854 = vmin.f32 %v831, %v837
          %v855 = vmin.f32 %v843, %v849
          %v856 = vmin.f32 %v854, %v855
          %v857 = vrot.slane %v856, 4
          %v858 = vmin.f32 %v856, %v857
          %v859 = vrot.slane %v858, 2
          %v860 = vmin.f32 %v858, %v859
          %v861 = vrot.slane %v860, 1
          %v862 = vmin.f32 %v860, %v861
          %v863 = vmin.f32 %v853, %v862
          %vm864 = vcmp.lt.s32.totalorder %v239, 128
          %vm865 = vmand %vm240, %vm864
          %866 = vst.msk [vmem:[%s852] sm:$0x1] %vm865, %v863
          %867 = vmin.xlane.f32.xlu0 %v831
          %v868 = vpop.xlane.xlu0 %867
          %869 = vmin.xlane.f32.xlu0 %v837
          %v870 = vpop.xlane.xlu0 %869
          %871 = vmin.xlane.f32.xlu0 %v843
          %v872 = vpop.xlane.xlu0 %871
          %873 = vmin.xlane.f32.xlu0 %v849
          %v874 = vpop.xlane.xlu0 %873
          %v875 = vmin.f32 %v254, %v868
          %v876 = vmin.f32 %v255, %v870
          %v877 = vmin.f32 %v256, %v872
          %v878 = vmin.f32 %v257, %v874
        $region33: #{tpu_custom_call.1} parent=27 // loop_footer
          %s253 = sadd.s32 1, %s249
        $region34: #{tpu_custom_call.1} parent=27 // loop_footer_branch
          %248 = sbr.rel target = $region30
        $region35: #{tpu_custom_call.1} parent=27 // loop_exit
          _
        %v879 = vlaneseq
        %v880 = vshrl.u32 %v879, 7
        %v881 = vadd.s32 %v880, 8
        %v882 = vadd.s32 %v880, 16
        %v883 = vadd.s32 %v880, 24
        %s884 = sadd.s32 %s238, 0
        %v885 = vstv %s884
        %v886 = vadd.s32 %v880, %v885
        %v887 = vadd.s32 %v881, %v885
        %v888 = vadd.s32 %v882, %v885
        %v889 = vadd.s32 %v883, %v885
        %v890 = vmax.f32 %v254, 0.0
        %v891 = vmax.f32 %v255, 0.0
        %v892 = vmax.f32 %v256, 0.0
        %v893 = vmax.f32 %v257, 0.0
        %v894 = vrsqrt.pop %v890
        %v895 = vmul.f32 %v890, %v894
        %vm896 = vcmp.eq.f32.partialorder %v890, inf
        %v897 = vsel %vm896, %v890, %v895
        %vm898 = vcmp.eq.f32.partialorder %v890, 0.0
        %v899 = vand.u32 %v890, 2147483648
        %v900 = vsel %vm898, %v899, %v897
        %v901 = vrsqrt.pop %v891
        %v902 = vmul.f32 %v891, %v901
        %vm903 = vcmp.eq.f32.partialorder %v891, inf
        %v904 = vsel %vm903, %v891, %v902
        %vm905 = vcmp.eq.f32.partialorder %v891, 0.0
        %v906 = vand.u32 %v891, 2147483648
        %v907 = vsel %vm905, %v906, %v904
        %v908 = vrsqrt.pop %v892
        %v909 = vmul.f32 %v892, %v908
        %vm910 = vcmp.eq.f32.partialorder %v892, inf
        %v911 = vsel %vm910, %v892, %v909
        %vm912 = vcmp.eq.f32.partialorder %v892, 0.0
        %v913 = vand.u32 %v892, 2147483648
        %v914 = vsel %vm912, %v913, %v911
        %v915 = vrsqrt.pop %v893
        %v916 = vmul.f32 %v893, %v915
        %vm917 = vcmp.eq.f32.partialorder %v893, inf
        %v918 = vsel %vm917, %v893, %v916
        %vm919 = vcmp.eq.f32.partialorder %v893, 0.0
        %v920 = vand.u32 %v893, 2147483648
        %v921 = vsel %vm919, %v920, %v918
        %vm922 = vcmp.lt.s32.totalorder %v886, 160
        %vm923 = vcmp.lt.s32.totalorder %v887, 160
        %vm924 = vcmp.lt.s32.totalorder %v888, 160
        %vm925 = vcmp.lt.s32.totalorder %v889, 160
        %v926 = vsel %vm922, %v900, 0.0
        %v927 = vsel %vm923, %v907, 0.0
        %v928 = vsel %vm924, %v914, 0.0
        %v929 = vsel %vm925, %v921, 0.0
        %vm930 = vcmask 7168
        %v931 = vsel %vm930, %v926, 0.0
        %v932 = vsel %vm930, %v927, 0.0
        %v933 = vadd.f32 %v931, %v932
        %v934 = vsel %vm930, %v928, 0.0
        %v935 = vadd.f32 %v933, %v934
        %v936 = vsel %vm930, %v929, 0.0
        %v937 = vadd.f32 %v935, %v936
        %938 = vadd.xlane.f32.xlu0 %v937
        %v939 = vpop.xlane.xlu0 %938
        %v940 = vrot.slane %v939, 4
        %v941 = vadd.f32 %v939, %v940
        %v942 = vrot.slane %v941, 2
        %v943 = vadd.f32 %v941, %v942
        %v944 = vrot.slane %v943, 1
        %v945 = vadd.f32 %v943, %v944
        %s946 = vtos %v945
        %v947 = vstv %s946
        %v948 = vadd.f32 %v947, 0.0
        %s949 = scalar_lea.vmem %s224, 32
        %v950 = vld [vmem:[%s949] sm:$0xff]
        %v951 = vld [vmem:[%s949 + $0x8] sm:$0xff]
        %v952 = vld [vmem:[%s949 + $0x10] sm:$0xff]
        %v953 = vld [vmem:[%s949 + $0x18] sm:$0xff]
        loop: start=0, step=1, limit=2
        $region36: #{tpu_custom_call.1} parent=27 // loop_pre_header
          _
        $region37: #{tpu_custom_call.1} parent=27 // loop_header
          %s955 = sphi 0, %s959
          %p956 = scmp.ge.s32.totalorder %s955, 2
          %v960 = vphi 1e+30, %v1581
          %v961 = vphi 1e+30, %v1582
          %v962 = vphi 1e+30, %v1583
          %v963 = vphi 1e+30, %v1584
        $region38: #{tpu_custom_call.1} parent=27 // loop_header_branch
          %958 = sbr.rel (%p956) target = $region42
        $region39: #{tpu_custom_call.1} parent=27 // loop_body
          %s964 = smul.u32 %s955, 128
          %s965 = sshra.s32 %s964, 7
          %s966 = sand.u32 %s964, 127
          %s967 = smul.addr %s965, 8
          %s968 = scalar_lea.vmem %s230, %s967
          %v969 = vld [vmem:[%s968] sm:$0xff]
          %vm970 = vcmask 64512
          %v972 = vsel %vm970, %v950, 0
          %v975 = vsel %vm970, %v951, 0
          %v978 = vsel %vm970, %v952, 0
          %v981 = vsel %vm970, %v953, 0
          %983 = vmatprep.subr.mxu0 0.0
          %v984 = vand.u32 %v969, 4294901760
          %985 = vmatpush1.msra.mxu0 %v984
          %986 = vmatprep.subr.mxu0 0.0
          %987 = vmatpush1.msra.mxu0 0.0
          %988 = vmatprep.subr.mxu0 0.0
          %989 = vmatpush1.msra.mxu0 0.0
          %990 = vmatprep.subr.mxu0 0.0
          %991 = vmatpush1.msra.mxu0 0.0
          %992 = vmatprep.subr.mxu0 0.0
          %993 = vmatpush1.msra.mxu0 0.0
          %994 = vmatprep.subr.mxu0 0.0
          %995 = vmatpush1.msra.mxu0 0.0
          %996 = vmatprep.subr.mxu0 0.0
          %997 = vmatpush1.msra.mxu0 0.0
          %998 = vmatprep.subr.mxu0 0.0
          %999 = vmatpush1.msra.mxu0 0.0
          %1000 = vmatprep.subr.mxu0 0.0
          %1001 = vmatpush1.msra.mxu0 0.0
          %1002 = vmatprep.subr.mxu0 0.0
          %1003 = vmatpush1.msra.mxu0 0.0
          %1004 = vmatprep.subr.mxu0 0.0
          %1005 = vmatpush1.msra.mxu0 0.0
          %1006 = vmatprep.subr.mxu0 0.0
          %1007 = vmatpush1.msra.mxu0 0.0
          %1008 = vmatprep.subr.mxu0 0.0
          %1009 = vmatpush1.msra.mxu0 0.0
          %1010 = vmatprep.subr.mxu0 0.0
          %1011 = vmatpush1.msra.mxu0 0.0
          %1012 = vmatprep.subr.mxu0 0.0
          %1013 = vmatpush1.msra.mxu0 0.0
          %1014 = vmatprep.subr.mxu0 0.0
          %1015 = vmatpush1.msra.mxu0 0.0
          %1016 = vmatprep.subr.mxu0 0.0
          %1017 = vmatpush1.msra.mxu0 0.0
          %1018 = vmatprep.subr.mxu0 0.0
          %1019 = vmatpush1.msra.mxu0 0.0
          %1020 = vmatprep.subr.mxu0 0.0
          %1021 = vmatpush1.msra.mxu0 0.0
          %1022 = vmatprep.subr.mxu0 0.0
          %1023 = vmatpush1.msra.mxu0 0.0
          %1024 = vmatprep.subr.mxu0 0.0
          %1025 = vmatpush1.msra.mxu0 0.0
          %1026 = vmatprep.subr.mxu0 0.0
          %1027 = vmatpush1.msra.mxu0 0.0
          %1028 = vmatprep.subr.mxu0 0.0
          %1029 = vmatpush1.msra.mxu0 0.0
          %1030 = vmatprep.subr.mxu0 0.0
          %1031 = vmatpush1.msra.mxu0 0.0
          %1032 = vmatprep.subr.mxu0 0.0
          %1033 = vmatpush1.msra.mxu0 0.0
          %1034 = vmatprep.subr.mxu0 0.0
          %1035 = vmatpush1.msra.mxu0 0.0
          %1036 = vmatprep.subr.mxu0 0.0
          %1037 = vmatpush1.msra.mxu0 0.0
          %1038 = vmatprep.subr.mxu0 0.0
          %1039 = vmatpush1.msra.mxu0 0.0
          %1040 = vmatprep.subr.mxu0 0.0
          %1041 = vmatpush1.msra.mxu0 0.0
          %1042 = vmatprep.subr.mxu0 0.0
          %1043 = vmatpush1.msra.mxu0 0.0
          %1044 = vmatprep.subr.mxu0 0.0
          %1045 = vmatpush1.msra.mxu0 0.0
          %1046 = vmatprep.subr.mxu0 0.0
          %1047 = vmatpush1.msra.mxu0 0.0
          %1048 = vmatprep.mubr.f32.mxu0 0.0
          %v1049 = vand.u32 %v972, 4294901760
          %v1050 = vsub.f32 %v972, %v1049
          %v1051 = vand.u32 %v1050, 4294901760
          %v1052 = vsub.f32 %v1050, %v1051
          %v1053 = vand.u32 %v1052, 4294901760
          %1054 = vmatmul.mubr.f32.gmra.mrb[0].mxu0 %v1053
          %v1055 = vpop.f32.mrb[0].mxu0
          %v1056 = vadd.f32 0.0, %v1055
          %v1057 = vpop.f32.mrb[0].mxu0
          %1058 = vmatprep.mubr.f32.mxu0 0.0
          %v1059 = vand.u32 %v975, 4294901760
          %v1060 = vsub.f32 %v975, %v1059
          %v1061 = vand.u32 %v1060, 4294901760
          %v1062 = vsub.f32 %v1060, %v1061
          %v1063 = vand.u32 %v1062, 4294901760
          %1064 = vmatmul.mubr.f32.gmra.mrb[0].mxu0 %v1063
          %v1065 = vpop.f32.mrb[0].mxu0
          %v1066 = vadd.f32 0.0, %v1065
          %v1067 = vpop.f32.mrb[0].mxu0
          %1068 = vmatprep.mubr.f32.mxu0 0.0
          %v1069 = vand.u32 %v978, 4294901760
          %v1070 = vsub.f32 %v978, %v1069
          %v1071 = vand.u32 %v1070, 4294901760
          %v1072 = vsub.f32 %v1070, %v1071
          %v1073 = vand.u32 %v1072, 4294901760
          %1074 = vmatmul.mubr.f32.gmra.mrb[0].mxu0 %v1073
          %v1075 = vpop.f32.mrb[0].mxu0
          %v1076 = vadd.f32 0.0, %v1075
          %v1077 = vpop.f32.mrb[0].mxu0
          %1078 = vmatprep.mubr.f32.mxu0 0.0
          %v1079 = vand.u32 %v981, 4294901760
          %v1080 = vsub.f32 %v981, %v1079
          %v1081 = vand.u32 %v1080, 4294901760
          %v1082 = vsub.f32 %v1080, %v1081
          %v1083 = vand.u32 %v1082, 4294901760
          %1084 = vmatmul.mubr.f32.gmra.mrb[0].mxu0 %v1083
          %v1085 = vpop.f32.mrb[0].mxu0
          %v1086 = vadd.f32 0.0, %v1085
          %v1087 = vpop.f32.mrb[0].mxu0
          %1088 = vdwg.mxu0
          %1089 = vmatprep.subr.mxu0 0.0
          %v1090 = vand.u32 %v969, 4294901760
          %v1091 = vsub.f32 %v969, %v1090
          %v1092 = vand.u32 %v1091, 4294901760
          %v1093 = vsub.f32 %v1091, %v1092
          %v1094 = vand.u32 %v1093, 4294901760
          %1095 = vmatpush1.msra.mxu0 %v1094
          %1096 = vmatprep.subr.mxu0 0.0
          %1097 = vmatpush1.msra.mxu0 0.0
          %1098 = vmatprep.subr.mxu0 0.0
          %1099 = vmatpush1.msra.mxu0 0.0
          %1100 = vmatprep.subr.mxu0 0.0
          %1101 = vmatpush1.msra.mxu0 0.0
          %1102 = vmatprep.subr.mxu0 0.0
          %1103 = vmatpush1.msra.mxu0 0.0
          %1104 = vmatprep.subr.mxu0 0.0
          %1105 = vmatpush1.msra.mxu0 0.0
          %1106 = vmatprep.subr.mxu0 0.0
          %1107 = vmatpush1.msra.mxu0 0.0
          %1108 = vmatprep.subr.mxu0 0.0
          %1109 = vmatpush1.msra.mxu0 0.0
          %1110 = vmatprep.subr.mxu0 0.0
          %1111 = vmatpush1.msra.mxu0 0.0
          %1112 = vmatprep.subr.mxu0 0.0
          %1113 = vmatpush1.msra.mxu0 0.0
          %1114 = vmatprep.subr.mxu0 0.0
          %1115 = vmatpush1.msra.mxu0 0.0
          %1116 = vmatprep.subr.mxu0 0.0
          %1117 = vmatpush1.msra.mxu0 0.0
          %1118 = vmatprep.subr.mxu0 0.0
          %1119 = vmatpush1.msra.mxu0 0.0
          %1120 = vmatprep.subr.mxu0 0.0
          %1121 = vmatpush1.msra.mxu0 0.0
          %1122 = vmatprep.subr.mxu0 0.0
          %1123 = vmatpush1.msra.mxu0 0.0
          %1124 = vmatprep.subr.mxu0 0.0
          %1125 = vmatpush1.msra.mxu0 0.0
          %1126 = vmatprep.subr.mxu0 0.0
          %1127 = vmatpush1.msra.mxu0 0.0
          %1128 = vmatprep.subr.mxu0 0.0
          %1129 = vmatpush1.msra.mxu0 0.0
          %1130 = vmatprep.subr.mxu0 0.0
          %1131 = vmatpush1.msra.mxu0 0.0
          %1132 = vmatprep.subr.mxu0 0.0
          %1133 = vmatpush1.msra.mxu0 0.0
          %1134 = vmatprep.subr.mxu0 0.0
          %1135 = vmatpush1.msra.mxu0 0.0
          %1136 = vmatprep.subr.mxu0 0.0
          %1137 = vmatpush1.msra.mxu0 0.0
          %1138 = vmatprep.subr.mxu0 0.0
          %1139 = vmatpush1.msra.mxu0 0.0
          %1140 = vmatprep.subr.mxu0 0.0
          %1141 = vmatpush1.msra.mxu0 0.0
          %1142 = vmatprep.subr.mxu0 0.0
          %1143 = vmatpush1.msra.mxu0 0.0
          %1144 = vmatprep.subr.mxu0 0.0
          %1145 = vmatpush1.msra.mxu0 0.0
          %1146 = vmatprep.subr.mxu0 0.0
          %1147 = vmatpush1.msra.mxu0 0.0
          %1148 = vmatprep.subr.mxu0 0.0
          %1149 = vmatpush1.msra.mxu0 0.0
          %1150 = vmatprep.subr.mxu0 0.0
          %1151 = vmatpush1.msra.mxu0 0.0
          %1152 = vmatprep.subr.mxu0 0.0
          %1153 = vmatpush1.msra.mxu0 0.0
          %1154 = vmatprep.subr.mxu0 0.0
          %1155 = vmatpush1.msra.mxu0 0.0
          %1156 = vmatprep.subr.mxu0 0.0
          %1157 = vmatpush1.msra.mxu0 0.0
          %1158 = vmatprep.mubr.f32.mxu0 0.0
          %v1159 = vand.u32 %v972, 4294901760
          %1160 = vmatmul.mubr.f32.gmra.mrb[0].mxu0 %v1159
          %v1161 = vpop.f32.mrb[0].mxu0
          %v1162 = vadd.f32 %v1056, %v1161
          %v1163 = vpop.f32.mrb[0].mxu0
          %1164 = vmatprep.mubr.f32.mxu0 0.0
          %v1165 = vand.u32 %v975, 4294901760
          %1166 = vmatmul.mubr.f32.gmra.mrb[0].mxu0 %v1165
          %v1167 = vpop.f32.mrb[0].mxu0
          %v1168 = vadd.f32 %v1066, %v1167
          %v1169 = vpop.f32.mrb[0].mxu0
          %1170 = vmatprep.mubr.f32.mxu0 0.0
          %v1171 = vand.u32 %v978, 4294901760
          %1172 = vmatmul.mubr.f32.gmra.mrb[0].mxu0 %v1171
          %v1173 = vpop.f32.mrb[0].mxu0
          %v1174 = vadd.f32 %v1076, %v1173
          %v1175 = vpop.f32.mrb[0].mxu0
          %1176 = vmatprep.mubr.f32.mxu0 0.0
          %v1177 = vand.u32 %v981, 4294901760
          %1178 = vmatmul.mubr.f32.gmra.mrb[0].mxu0 %v1177
          %v1179 = vpop.f32.mrb[0].mxu0
          %v1180 = vadd.f32 %v1086, %v1179
          %v1181 = vpop.f32.mrb[0].mxu0
          %1182 = vdwg.mxu0
          %1183 = vmatprep.subr.mxu0 0.0
          %v1184 = vand.u32 %v969, 4294901760
          %v1185 = vsub.f32 %v969, %v1184
          %1186 = vmatpush1.msra.mxu0 %v1185
          %1187 = vmatprep.subr.mxu0 0.0
          %1188 = vmatpush1.msra.mxu0 0.0
          %1189 = vmatprep.subr.mxu0 0.0
          %1190 = vmatpush1.msra.mxu0 0.0
          %1191 = vmatprep.subr.mxu0 0.0
          %1192 = vmatpush1.msra.mxu0 0.0
          %1193 = vmatprep.subr.mxu0 0.0
          %1194 = vmatpush1.msra.mxu0 0.0
          %1195 = vmatprep.subr.mxu0 0.0
          %1196 = vmatpush1.msra.mxu0 0.0
          %1197 = vmatprep.subr.mxu0 0.0
          %1198 = vmatpush1.msra.mxu0 0.0
          %1199 = vmatprep.subr.mxu0 0.0
          %1200 = vmatpush1.msra.mxu0 0.0
          %1201 = vmatprep.subr.mxu0 0.0
          %1202 = vmatpush1.msra.mxu0 0.0
          %1203 = vmatprep.subr.mxu0 0.0
          %1204 = vmatpush1.msra.mxu0 0.0
          %1205 = vmatprep.subr.mxu0 0.0
          %1206 = vmatpush1.msra.mxu0 0.0
          %1207 = vmatprep.subr.mxu0 0.0
          %1208 = vmatpush1.msra.mxu0 0.0
          %1209 = vmatprep.subr.mxu0 0.0
          %1210 = vmatpush1.msra.mxu0 0.0
          %1211 = vmatprep.subr.mxu0 0.0
          %1212 = vmatpush1.msra.mxu0 0.0
          %1213 = vmatprep.subr.mxu0 0.0
          %1214 = vmatpush1.msra.mxu0 0.0
          %1215 = vmatprep.subr.mxu0 0.0
          %1216 = vmatpush1.msra.mxu0 0.0
          %1217 = vmatprep.subr.mxu0 0.0
          %1218 = vmatpush1.msra.mxu0 0.0
          %1219 = vmatprep.subr.mxu0 0.0
          %1220 = vmatpush1.msra.mxu0 0.0
          %1221 = vmatprep.subr.mxu0 0.0
          %1222 = vmatpush1.msra.mxu0 0.0
          %1223 = vmatprep.subr.mxu0 0.0
          %1224 = vmatpush1.msra.mxu0 0.0
          %1225 = vmatprep.subr.mxu0 0.0
          %1226 = vmatpush1.msra.mxu0 0.0
          %1227 = vmatprep.subr.mxu0 0.0
          %1228 = vmatpush1.msra.mxu0 0.0
          %1229 = vmatprep.subr.mxu0 0.0
          %1230 = vmatpush1.msra.mxu0 0.0
          %1231 = vmatprep.subr.mxu0 0.0
          %1232 = vmatpush1.msra.mxu0 0.0
          %1233 = vmatprep.subr.mxu0 0.0
          %1234 = vmatpush1.msra.mxu0 0.0
          %1235 = vmatprep.subr.mxu0 0.0
          %1236 = vmatpush1.msra.mxu0 0.0
          %1237 = vmatprep.subr.mxu0 0.0
          %1238 = vmatpush1.msra.mxu0 0.0
          %1239 = vmatprep.subr.mxu0 0.0
          %1240 = vmatpush1.msra.mxu0 0.0
          %1241 = vmatprep.subr.mxu0 0.0
          %1242 = vmatpush1.msra.mxu0 0.0
          %1243 = vmatprep.subr.mxu0 0.0
          %1244 = vmatpush1.msra.mxu0 0.0
          %1245 = vmatprep.subr.mxu0 0.0
          %1246 = vmatpush1.msra.mxu0 0.0
          %1247 = vmatprep.subr.mxu0 0.0
          %1248 = vmatpush1.msra.mxu0 0.0
          %1249 = vmatprep.mubr.f32.mxu0 0.0
          %v1250 = vand.u32 %v972, 4294901760
          %v1251 = vsub.f32 %v972, %v1250
          %1252 = vmatmul.mubr.f32.gmra.mrb[0].mxu0 %v1251
          %v1253 = vpop.f32.mrb[0].mxu0
          %v1254 = vadd.f32 %v1162, %v1253
          %v1255 = vpop.f32.mrb[0].mxu0
          %1256 = vmatprep.mubr.f32.mxu0 0.0
          %v1257 = vand.u32 %v975, 4294901760
          %v1258 = vsub.f32 %v975, %v1257
          %1259 = vmatmul.mubr.f32.gmra.mrb[0].mxu0 %v1258
          %v1260 = vpop.f32.mrb[0].mxu0
          %v1261 = vadd.f32 %v1168, %v1260
          %v1262 = vpop.f32.mrb[0].mxu0
          %1263 = vmatprep.mubr.f32.mxu0 0.0
          %v1264 = vand.u32 %v978, 4294901760
          %v1265 = vsub.f32 %v978, %v1264
          %1266 = vmatmul.mubr.f32.gmra.mrb[0].mxu0 %v1265
          %v1267 = vpop.f32.mrb[0].mxu0
          %v1268 = vadd.f32 %v1174, %v1267
          %v1269 = vpop.f32.mrb[0].mxu0
          %1270 = vmatprep.mubr.f32.mxu0 0.0
          %v1271 = vand.u32 %v981, 4294901760
          %v1272 = vsub.f32 %v981, %v1271
          %1273 = vmatmul.mubr.f32.gmra.mrb[0].mxu0 %v1272
          %v1274 = vpop.f32.mrb[0].mxu0
          %v1275 = vadd.f32 %v1180, %v1274
          %v1276 = vpop.f32.mrb[0].mxu0
          %1277 = vdwg.mxu0
          %1278 = vmatprep.subr.mxu0 0.0
          %v1279 = vand.u32 %v969, 4294901760
          %1280 = vmatpush1.msra.mxu0 %v1279
          %1281 = vmatprep.subr.mxu0 0.0
          %1282 = vmatpush1.msra.mxu0 0.0
          %1283 = vmatprep.subr.mxu0 0.0
          %1284 = vmatpush1.msra.mxu0 0.0
          %1285 = vmatprep.subr.mxu0 0.0
          %1286 = vmatpush1.msra.mxu0 0.0
          %1287 = vmatprep.subr.mxu0 0.0
          %1288 = vmatpush1.msra.mxu0 0.0
          %1289 = vmatprep.subr.mxu0 0.0
          %1290 = vmatpush1.msra.mxu0 0.0
          %1291 = vmatprep.subr.mxu0 0.0
          %1292 = vmatpush1.msra.mxu0 0.0
          %1293 = vmatprep.subr.mxu0 0.0
          %1294 = vmatpush1.msra.mxu0 0.0
          %1295 = vmatprep.subr.mxu0 0.0
          %1296 = vmatpush1.msra.mxu0 0.0
          %1297 = vmatprep.subr.mxu0 0.0
          %1298 = vmatpush1.msra.mxu0 0.0
          %1299 = vmatprep.subr.mxu0 0.0
          %1300 = vmatpush1.msra.mxu0 0.0
          %1301 = vmatprep.subr.mxu0 0.0
          %1302 = vmatpush1.msra.mxu0 0.0
          %1303 = vmatprep.subr.mxu0 0.0
          %1304 = vmatpush1.msra.mxu0 0.0
          %1305 = vmatprep.subr.mxu0 0.0
          %1306 = vmatpush1.msra.mxu0 0.0
          %1307 = vmatprep.subr.mxu0 0.0
          %1308 = vmatpush1.msra.mxu0 0.0
          %1309 = vmatprep.subr.mxu0 0.0
          %1310 = vmatpush1.msra.mxu0 0.0
          %1311 = vmatprep.subr.mxu0 0.0
          %1312 = vmatpush1.msra.mxu0 0.0
          %1313 = vmatprep.subr.mxu0 0.0
          %1314 = vmatpush1.msra.mxu0 0.0
          %1315 = vmatprep.subr.mxu0 0.0
          %1316 = vmatpush1.msra.mxu0 0.0
          %1317 = vmatprep.subr.mxu0 0.0
          %1318 = vmatpush1.msra.mxu0 0.0
          %1319 = vmatprep.subr.mxu0 0.0
          %1320 = vmatpush1.msra.mxu0 0.0
          %1321 = vmatprep.subr.mxu0 0.0
          %1322 = vmatpush1.msra.mxu0 0.0
          %1323 = vmatprep.subr.mxu0 0.0
          %1324 = vmatpush1.msra.mxu0 0.0
          %1325 = vmatprep.subr.mxu0 0.0
          %1326 = vmatpush1.msra.mxu0 0.0
          %1327 = vmatprep.subr.mxu0 0.0
          %1328 = vmatpush1.msra.mxu0 0.0
          %1329 = vmatprep.subr.mxu0 0.0
          %1330 = vmatpush1.msra.mxu0 0.0
          %1331 = vmatprep.subr.mxu0 0.0
          %1332 = vmatpush1.msra.mxu0 0.0
          %1333 = vmatprep.subr.mxu0 0.0
          %1334 = vmatpush1.msra.mxu0 0.0
          %1335 = vmatprep.subr.mxu0 0.0
          %1336 = vmatpush1.msra.mxu0 0.0
          %1337 = vmatprep.subr.mxu0 0.0
          %1338 = vmatpush1.msra.mxu0 0.0
          %1339 = vmatprep.subr.mxu0 0.0
          %1340 = vmatpush1.msra.mxu0 0.0
          %1341 = vmatprep.subr.mxu0 0.0
          %1342 = vmatpush1.msra.mxu0 0.0
          %1343 = vmatprep.mubr.f32.mxu0 0.0
          %v1344 = vand.u32 %v972, 4294901760
          %v1345 = vsub.f32 %v972, %v1344
          %v1346 = vand.u32 %v1345, 4294901760
          %1347 = vmatmul.mubr.f32.gmra.mrb[0].mxu0 %v1346
          %v1348 = vpop.f32.mrb[0].mxu0
          %v1349 = vadd.f32 %v1254, %v1348
          %v1350 = vpop.f32.mrb[0].mxu0
          %1351 = vmatprep.mubr.f32.mxu0 0.0
          %v1352 = vand.u32 %v975, 4294901760
          %v1353 = vsub.f32 %v975, %v1352
          %v1354 = vand.u32 %v1353, 4294901760
          %1355 = vmatmul.mubr.f32.gmra.mrb[0].mxu0 %v1354
          %v1356 = vpop.f32.mrb[0].mxu0
          %v1357 = vadd.f32 %v1261, %v1356
          %v1358 = vpop.f32.mrb[0].mxu0
          %1359 = vmatprep.mubr.f32.mxu0 0.0
          %v1360 = vand.u32 %v978, 4294901760
          %v1361 = vsub.f32 %v978, %v1360
          %v1362 = vand.u32 %v1361, 4294901760
          %1363 = vmatmul.mubr.f32.gmra.mrb[0].mxu0 %v1362
          %v1364 = vpop.f32.mrb[0].mxu0
          %v1365 = vadd.f32 %v1268, %v1364
          %v1366 = vpop.f32.mrb[0].mxu0
          %1367 = vmatprep.mubr.f32.mxu0 0.0
          %v1368 = vand.u32 %v981, 4294901760
          %v1369 = vsub.f32 %v981, %v1368
          %v1370 = vand.u32 %v1369, 4294901760
          %1371 = vmatmul.mubr.f32.gmra.mrb[0].mxu0 %v1370
          %v1372 = vpop.f32.mrb[0].mxu0
          %v1373 = vadd.f32 %v1275, %v1372
          %v1374 = vpop.f32.mrb[0].mxu0
          %1375 = vdwg.mxu0
          %1376 = vmatprep.subr.mxu0 0.0
          %v1377 = vand.u32 %v969, 4294901760
          %v1378 = vsub.f32 %v969, %v1377
          %v1379 = vand.u32 %v1378, 4294901760
          %1380 = vmatpush1.msra.mxu0 %v1379
          %1381 = vmatprep.subr.mxu0 0.0
          %1382 = vmatpush1.msra.mxu0 0.0
          %1383 = vmatprep.subr.mxu0 0.0
          %1384 = vmatpush1.msra.mxu0 0.0
          %1385 = vmatprep.subr.mxu0 0.0
          %1386 = vmatpush1.msra.mxu0 0.0
          %1387 = vmatprep.subr.mxu0 0.0
          %1388 = vmatpush1.msra.mxu0 0.0
          %1389 = vmatprep.subr.mxu0 0.0
          %1390 = vmatpush1.msra.mxu0 0.0
          %1391 = vmatprep.subr.mxu0 0.0
          %1392 = vmatpush1.msra.mxu0 0.0
          %1393 = vmatprep.subr.mxu0 0.0
          %1394 = vmatpush1.msra.mxu0 0.0
          %1395 = vmatprep.subr.mxu0 0.0
          %1396 = vmatpush1.msra.mxu0 0.0
          %1397 = vmatprep.subr.mxu0 0.0
          %1398 = vmatpush1.msra.mxu0 0.0
          %1399 = vmatprep.subr.mxu0 0.0
          %1400 = vmatpush1.msra.mxu0 0.0
          %1401 = vmatprep.subr.mxu0 0.0
          %1402 = vmatpush1.msra.mxu0 0.0
          %1403 = vmatprep.subr.mxu0 0.0
          %1404 = vmatpush1.msra.mxu0 0.0
          %1405 = vmatprep.subr.mxu0 0.0
          %1406 = vmatpush1.msra.mxu0 0.0
          %1407 = vmatprep.subr.mxu0 0.0
          %1408 = vmatpush1.msra.mxu0 0.0
          %1409 = vmatprep.subr.mxu0 0.0
          %1410 = vmatpush1.msra.mxu0 0.0
          %1411 = vmatprep.subr.mxu0 0.0
          %1412 = vmatpush1.msra.mxu0 0.0
          %1413 = vmatprep.subr.mxu0 0.0
          %1414 = vmatpush1.msra.mxu0 0.0
          %1415 = vmatprep.subr.mxu0 0.0
          %1416 = vmatpush1.msra.mxu0 0.0
          %1417 = vmatprep.subr.mxu0 0.0
          %1418 = vmatpush1.msra.mxu0 0.0
          %1419 = vmatprep.subr.mxu0 0.0
          %1420 = vmatpush1.msra.mxu0 0.0
          %1421 = vmatprep.subr.mxu0 0.0
          %1422 = vmatpush1.msra.mxu0 0.0
          %1423 = vmatprep.subr.mxu0 0.0
          %1424 = vmatpush1.msra.mxu0 0.0
          %1425 = vmatprep.subr.mxu0 0.0
          %1426 = vmatpush1.msra.mxu0 0.0
          %1427 = vmatprep.subr.mxu0 0.0
          %1428 = vmatpush1.msra.mxu0 0.0
          %1429 = vmatprep.subr.mxu0 0.0
          %1430 = vmatpush1.msra.mxu0 0.0
          %1431 = vmatprep.subr.mxu0 0.0
          %1432 = vmatpush1.msra.mxu0 0.0
          %1433 = vmatprep.subr.mxu0 0.0
          %1434 = vmatpush1.msra.mxu0 0.0
          %1435 = vmatprep.subr.mxu0 0.0
          %1436 = vmatpush1.msra.mxu0 0.0
          %1437 = vmatprep.subr.mxu0 0.0
          %1438 = vmatpush1.msra.mxu0 0.0
          %1439 = vmatprep.subr.mxu0 0.0
          %1440 = vmatpush1.msra.mxu0 0.0
          %1441 = vmatprep.subr.mxu0 0.0
          %1442 = vmatpush1.msra.mxu0 0.0
          %1443 = vmatprep.mubr.f32.mxu0 0.0
          %v1444 = vand.u32 %v972, 4294901760
          %1445 = vmatmul.mubr.f32.gmra.mrb[0].mxu0 %v1444
          %v1446 = vpop.f32.mrb[0].mxu0
          %v1447 = vadd.f32 %v1349, %v1446
          %v1448 = vpop.f32.mrb[0].mxu0
          %1449 = vmatprep.mubr.f32.mxu0 0.0
          %v1450 = vand.u32 %v975, 4294901760
          %1451 = vmatmul.mubr.f32.gmra.mrb[0].mxu0 %v1450
          %v1452 = vpop.f32.mrb[0].mxu0
          %v1453 = vadd.f32 %v1357, %v1452
          %v1454 = vpop.f32.mrb[0].mxu0
          %1455 = vmatprep.mubr.f32.mxu0 0.0
          %v1456 = vand.u32 %v978, 4294901760
          %1457 = vmatmul.mubr.f32.gmra.mrb[0].mxu0 %v1456
          %v1458 = vpop.f32.mrb[0].mxu0
          %v1459 = vadd.f32 %v1365, %v1458
          %v1460 = vpop.f32.mrb[0].mxu0
          %1461 = vmatprep.mubr.f32.mxu0 0.0
          %v1462 = vand.u32 %v981, 4294901760
          %1463 = vmatmul.mubr.f32.gmra.mrb[0].mxu0 %v1462
          %v1464 = vpop.f32.mrb[0].mxu0
          %v1465 = vadd.f32 %v1373, %v1464
          %v1466 = vpop.f32.mrb[0].mxu0
          %1467 = vdwg.mxu0
          %1468 = vmatprep.subr.mxu0 0.0
          %v1469 = vand.u32 %v969, 4294901760
          %1470 = vmatpush1.msra.mxu0 %v1469
          %1471 = vmatprep.subr.mxu0 0.0
          %1472 = vmatpush1.msra.mxu0 0.0
          %1473 = vmatprep.subr.mxu0 0.0
          %1474 = vmatpush1.msra.mxu0 0.0
          %1475 = vmatprep.subr.mxu0 0.0
          %1476 = vmatpush1.msra.mxu0 0.0
          %1477 = vmatprep.subr.mxu0 0.0
          %1478 = vmatpush1.msra.mxu0 0.0
          %1479 = vmatprep.subr.mxu0 0.0
          %1480 = vmatpush1.msra.mxu0 0.0
          %1481 = vmatprep.subr.mxu0 0.0
          %1482 = vmatpush1.msra.mxu0 0.0
          %1483 = vmatprep.subr.mxu0 0.0
          %1484 = vmatpush1.msra.mxu0 0.0
          %1485 = vmatprep.subr.mxu0 0.0
          %1486 = vmatpush1.msra.mxu0 0.0
          %1487 = vmatprep.subr.mxu0 0.0
          %1488 = vmatpush1.msra.mxu0 0.0
          %1489 = vmatprep.subr.mxu0 0.0
          %1490 = vmatpush1.msra.mxu0 0.0
          %1491 = vmatprep.subr.mxu0 0.0
          %1492 = vmatpush1.msra.mxu0 0.0
          %1493 = vmatprep.subr.mxu0 0.0
          %1494 = vmatpush1.msra.mxu0 0.0
          %1495 = vmatprep.subr.mxu0 0.0
          %1496 = vmatpush1.msra.mxu0 0.0
          %1497 = vmatprep.subr.mxu0 0.0
          %1498 = vmatpush1.msra.mxu0 0.0
          %1499 = vmatprep.subr.mxu0 0.0
          %1500 = vmatpush1.msra.mxu0 0.0
          %1501 = vmatprep.subr.mxu0 0.0
          %1502 = vmatpush1.msra.mxu0 0.0
          %1503 = vmatprep.subr.mxu0 0.0
          %1504 = vmatpush1.msra.mxu0 0.0
          %1505 = vmatprep.subr.mxu0 0.0
          %1506 = vmatpush1.msra.mxu0 0.0
          %1507 = vmatprep.subr.mxu0 0.0
          %1508 = vmatpush1.msra.mxu0 0.0
          %1509 = vmatprep.subr.mxu0 0.0
          %1510 = vmatpush1.msra.mxu0 0.0
          %1511 = vmatprep.subr.mxu0 0.0
          %1512 = vmatpush1.msra.mxu0 0.0
          %1513 = vmatprep.subr.mxu0 0.0
          %1514 = vmatpush1.msra.mxu0 0.0
          %1515 = vmatprep.subr.mxu0 0.0
          %1516 = vmatpush1.msra.mxu0 0.0
          %1517 = vmatprep.subr.mxu0 0.0
          %1518 = vmatpush1.msra.mxu0 0.0
          %1519 = vmatprep.subr.mxu0 0.0
          %1520 = vmatpush1.msra.mxu0 0.0
          %1521 = vmatprep.subr.mxu0 0.0
          %1522 = vmatpush1.msra.mxu0 0.0
          %1523 = vmatprep.subr.mxu0 0.0
          %1524 = vmatpush1.msra.mxu0 0.0
          %1525 = vmatprep.subr.mxu0 0.0
          %1526 = vmatpush1.msra.mxu0 0.0
          %1527 = vmatprep.subr.mxu0 0.0
          %1528 = vmatpush1.msra.mxu0 0.0
          %1529 = vmatprep.subr.mxu0 0.0
          %1530 = vmatpush1.msra.mxu0 0.0
          %1531 = vmatprep.subr.mxu0 0.0
          %1532 = vmatpush1.msra.mxu0 0.0
          %1533 = vmatprep.mubr.f32.mxu0 0.0
          %v1534 = vand.u32 %v972, 4294901760
          %1535 = vmatmul.mubr.f32.gmra.mrb[0].mxu0 %v1534
          %v1536 = vpop.f32.mrb[0].mxu0
          %v1537 = vadd.f32 %v1447, %v1536
          %v1538 = vpop.f32.mrb[0].mxu0
          %1539 = vmatprep.mubr.f32.mxu0 0.0
          %v1540 = vand.u32 %v975, 4294901760
          %1541 = vmatmul.mubr.f32.gmra.mrb[0].mxu0 %v1540
          %v1542 = vpop.f32.mrb[0].mxu0
          %v1543 = vadd.f32 %v1453, %v1542
          %v1544 = vpop.f32.mrb[0].mxu0
          %1545 = vmatprep.mubr.f32.mxu0 0.0
          %v1546 = vand.u32 %v978, 4294901760
          %1547 = vmatmul.mubr.f32.gmra.mrb[0].mxu0 %v1546
          %v1548 = vpop.f32.mrb[0].mxu0
          %v1549 = vadd.f32 %v1459, %v1548
          %v1550 = vpop.f32.mrb[0].mxu0
          %1551 = vmatprep.mubr.f32.mxu0 0.0
          %v1552 = vand.u32 %v981, 4294901760
          %1553 = vmatmul.mubr.f32.gmra.mrb[0].mxu0 %v1552
          %v1554 = vpop.f32.mrb[0].mxu0
          %v1555 = vadd.f32 %v1465, %v1554
          %v1556 = vpop.f32.mrb[0].mxu0
          %1557 = vdwg.mxu0
          %s1558 = scalar_lea.vmem %s215, %s965 [#allocation2]
          %v1559 = vld [vmem:[%s1558] sm:$0x1]
          %v1560 = vmin.f32 %v1537, %v1543
          %v1561 = vmin.f32 %v1549, %v1555
          %v1562 = vmin.f32 %v1560, %v1561
          %v1563 = vrot.slane %v1562, 4
          %v1564 = vmin.f32 %v1562, %v1563
          %v1565 = vrot.slane %v1564, 2
          %v1566 = vmin.f32 %v1564, %v1565
          %v1567 = vrot.slane %v1566, 1
          %v1568 = vmin.f32 %v1566, %v1567
          %v1569 = vmin.f32 %v1559, %v1568
          %vm1570 = vcmp.lt.s32.totalorder %v239, 128
          %vm1571 = vmand %vm240, %vm1570
          %1572 = vst.msk [vmem:[%s1558] sm:$0x1] %vm1571, %v1569
          %1573 = vmin.xlane.f32.xlu0 %v1537
          %v1574 = vpop.xlane.xlu0 %1573
          %1575 = vmin.xlane.f32.xlu0 %v1543
          %v1576 = vpop.xlane.xlu0 %1575
          %1577 = vmin.xlane.f32.xlu0 %v1549
          %v1578 = vpop.xlane.xlu0 %1577
          %1579 = vmin.xlane.f32.xlu0 %v1555
          %v1580 = vpop.xlane.xlu0 %1579
          %v1581 = vmin.f32 %v960, %v1574
          %v1582 = vmin.f32 %v961, %v1576
          %v1583 = vmin.f32 %v962, %v1578
          %v1584 = vmin.f32 %v963, %v1580
        $region40: #{tpu_custom_call.1} parent=27 // loop_footer
          %s959 = sadd.s32 1, %s955
        $region41: #{tpu_custom_call.1} parent=27 // loop_footer_branch
          %954 = sbr.rel target = $region37
        $region42: #{tpu_custom_call.1} parent=27 // loop_exit
          _
        %s1585 = sadd.s32 %s238, 32
        %v1586 = vstv %s1585
        %v1587 = vadd.s32 %v880, %v1586
        %v1588 = vadd.s32 %v881, %v1586
        %v1589 = vadd.s32 %v882, %v1586
        %v1590 = vadd.s32 %v883, %v1586
        %v1591 = vmax.f32 %v960, 0.0
        %v1592 = vmax.f32 %v961, 0.0
        %v1593 = vmax.f32 %v962, 0.0
        %v1594 = vmax.f32 %v963, 0.0
        %v1595 = vrsqrt.pop %v1591
        %v1596 = vmul.f32 %v1591, %v1595
        %vm1597 = vcmp.eq.f32.partialorder %v1591, inf
        %v1598 = vsel %vm1597, %v1591, %v1596
        %vm1599 = vcmp.eq.f32.partialorder %v1591, 0.0
        %v1600 = vand.u32 %v1591, 2147483648
        %v1601 = vsel %vm1599, %v1600, %v1598
        %v1602 = vrsqrt.pop %v1592
        %v1603 = vmul.f32 %v1592, %v1602
        %vm1604 = vcmp.eq.f32.partialorder %v1592, inf
        %v1605 = vsel %vm1604, %v1592, %v1603
        %vm1606 = vcmp.eq.f32.partialorder %v1592, 0.0
        %v1607 = vand.u32 %v1592, 2147483648
        %v1608 = vsel %vm1606, %v1607, %v1605
        %v1609 = vrsqrt.pop %v1593
        %v1610 = vmul.f32 %v1593, %v1609
        %vm1611 = vcmp.eq.f32.partialorder %v1593, inf
        %v1612 = vsel %vm1611, %v1593, %v1610
        %vm1613 = vcmp.eq.f32.partialorder %v1593, 0.0
        %v1614 = vand.u32 %v1593, 2147483648
        %v1615 = vsel %vm1613, %v1614, %v1612
        %v1616 = vrsqrt.pop %v1594
        %v1617 = vmul.f32 %v1594, %v1616
        %vm1618 = vcmp.eq.f32.partialorder %v1594, inf
        %v1619 = vsel %vm1618, %v1594, %v1617
        %vm1620 = vcmp.eq.f32.partialorder %v1594, 0.0
        %v1621 = vand.u32 %v1594, 2147483648
        %v1622 = vsel %vm1620, %v1621, %v1619
        %vm1623 = vcmp.lt.s32.totalorder %v1587, 160
        %vm1624 = vcmp.lt.s32.totalorder %v1588, 160
        %vm1625 = vcmp.lt.s32.totalorder %v1589, 160
        %vm1626 = vcmp.lt.s32.totalorder %v1590, 160
        %v1627 = vsel %vm1623, %v1601, 0.0
        %v1628 = vsel %vm1624, %v1608, 0.0
        %v1629 = vsel %vm1625, %v1615, 0.0
        %v1630 = vsel %vm1626, %v1622, 0.0
        %v1631 = vsel %vm930, %v1627, 0.0
        %v1632 = vsel %vm930, %v1628, 0.0
        %v1633 = vadd.f32 %v1631, %v1632
        %v1634 = vsel %vm930, %v1629, 0.0
        %v1635 = vadd.f32 %v1633, %v1634
        %v1636 = vsel %vm930, %v1630, 0.0
        %v1637 = vadd.f32 %v1635, %v1636
        %1638 = vadd.xlane.f32.xlu0 %v1637
        %v1639 = vpop.xlane.xlu0 %1638
        %v1640 = vrot.slane %v1639, 4
        %v1641 = vadd.f32 %v1639, %v1640
        %v1642 = vrot.slane %v1641, 2
        %v1643 = vadd.f32 %v1641, %v1642
        %v1644 = vrot.slane %v1643, 1
        %v1645 = vadd.f32 %v1643, %v1644
        %s1646 = vtos %v1645
        %v1647 = vstv %s1646
        %v1648 = vadd.f32 %v948, %v1647
        %vm1649 = vcmask 0
        %1650 = vst.msk [vmem:[%s237] sm:$0x1] %vm1649, %v1648
        %p1651 = scmp.lt.s32.totalorder %s22, 1
        %s1652 = scalar_select %p1651, %s22, 1
        %p1653 = scmp.lt.s32.totalorder %s23, 2
        %s1654 = scalar_select %p1653, %s23, 2
        %s1655 = smul.addr %s1652, 3
        %s1656 = sadd.s32 %s1654, %s1655
        %s1657 = scalar_lea.vmem %s2, %s1656
        %s1658 = sand.u32 %s122, 1
        %s1659 = scalar_lea.sflag [#allocation3], %s1658
        %s1660 = sand.u32 %s122, 1
        %s1661 = smul.addr %s1660, 2
        %s1662 = scalar_lea.vmem [#allocation2], %s1661
        // Predicated region
        $region43: #{tpu_custom_call.1} parent=27 // pred_check
          %p1663 = pneg %p104
        $region44: #{tpu_custom_call.1} parent=27 // pred_check_branch
          %1665 = sbr.rel (%p1663) target = $region46
        $region45: #{tpu_custom_call.1} parent=27 // pred_region
          _
        $region46: #{tpu_custom_call.1} parent=27 // pred_fallthru
          _
        // Predicated region
        $region47: #{tpu_custom_call.1} parent=27 // pred_check
          %p1666 = pneg %p132
        $region48: #{tpu_custom_call.1} parent=27 // pred_check_branch
          %1668 = sbr.rel (%p1666) target = $region50
        $region49: #{tpu_custom_call.1} parent=27 // pred_region
          %s1670 = ssub.s32 32, 32
          %1671 = vsyncadd %s1659, %s1670
          %s1672 = smul.addr %s23, 2
          %s1673 = smul.addr %s22, 6
          %s1674 = sadd.s32 %s1672, %s1673
          %s1675 = smul.addr %s1674, 16
          %s1676 = scalar_lea.hbm %s3, %s1675
          %s1678 = sshll.u32 %s1662, 4
          %s1679 = int_to_ptr.vmem [resolvable:$true] %s1678
          %1681 = dma.vmem_to_hbm [thread:$0]  %s1679, 32, %s1676, %s1659
        $region50: #{tpu_custom_call.1} parent=27 // pred_fallthru
          _
      $region28: #{tpu_custom_call.1} parent=5 // pred_fallthru
        _
      %p1682 = scmp.le.s32.totalorder 2, %s13
      // Predicated region
      $region51: #{tpu_custom_call.1} parent=5 // pred_check
        %p1683 = pneg %p1682
      $region52: #{tpu_custom_call.1} parent=5 // pred_check_branch
        %1685 = sbr.rel (%p1683) target = $region54
      $region53: #{tpu_custom_call.1} parent=5 // pred_region
        %s1686 = ssub.s32 %s13, 2
        // Predicated region
        $region55: #{tpu_custom_call.1} parent=53 // pred_check
          %p1687 = pneg %p110
        $region56: #{tpu_custom_call.1} parent=53 // pred_check_branch
          %1689 = sbr.rel (%p1687) target = $region58
        $region57: #{tpu_custom_call.1} parent=53 // pred_region
          %p1690 = scmp.lt.s32.totalorder %s24, 1
          %s1691 = scalar_select %p1690, %s24, 1
          %p1692 = scmp.lt.s32.totalorder %s25, 2
          %s1693 = scalar_select %p1692, %s25, 2
          %s1694 = smul.addr %s1691, 3
          %s1695 = sadd.s32 %s1693, %s1694
          %s1696 = scalar_lea.vmem %s2, %s1695
        $region58: #{tpu_custom_call.1} parent=53 // pred_fallthru
          _
        // Predicated region
        $region59: #{tpu_custom_call.1} parent=53 // pred_check
          %p1697 = pneg %p138
        $region60: #{tpu_custom_call.1} parent=53 // pred_check_branch
          %1699 = sbr.rel (%p1697) target = $region62
        $region61: #{tpu_custom_call.1} parent=53 // pred_region
          %s1700 = sand.u32 %s123, 1
          %s1701 = scalar_lea.sflag [#allocation3], %s1700
          %s1702 = sand.u32 %s123, 1
          %s1703 = smul.addr %s1702, 2
          %s1704 = scalar_lea.vmem [#allocation2], %s1703
          %1705 = dma.done %s1701, 32
        $region62: #{tpu_custom_call.1} parent=53 // pred_fallthru
          _
      $region54: #{tpu_custom_call.1} parent=5 // pred_fallthru
        _
    $region6: #{tpu_custom_call.1} parent=1 // loop_footer
      %s17 = sadd.s32 1, %s13
    $region7: #{tpu_custom_call.1} parent=1 // loop_footer_branch
      %12 = sbr.rel target = $region3
    $region8: #{tpu_custom_call.1} parent=1 // loop_exit
      _
    %1706 = vsyncpa [#allocation3], 1
    %s1707 = scalar_lea.sflag [#allocation3], 1
    %1708 = vsyncpa %s1707, 1

</llo_original>
